<compile_context>
chip_gen: v7x
topology: tpu7x:2x2x1
jax: 0.10.0
libtpu: 0.0.40
codegen_flags: <defaults>
</compile_context>

<pallas_src>
import functools

import jax
import jax.numpy as jnp
from jax.experimental import pallas as pl
from jax.experimental.pallas import tpu as pltpu

_BN_EPS = 1e-5
# Budget for v7x's 64 MiB physical VMEM (also fine on v5e/v6e).
_VMEM_LIMIT = 32 * 1024 * 1024


def _round_up(x, m):
    return (x + m - 1) // m * m


def _pad2d(a, rows, cols):
    r, c = a.shape
    if r == rows and c == cols:
        return a
    return jnp.pad(a, ((0, rows - r), (0, cols - c)))


# ---------------------------------------------------------------------------
# Pallas kernels (the hot path).
# ---------------------------------------------------------------------------
def _mm_bn_kernel(x_ref, w_ref, b_ref, o_ref, acc_ref, *, relu):
    """bf16 MXU matmul tile, f32 accumulator, fused folded-BN bias (+ReLU)."""
    @pl.when(pl.program_id(2) == 0)
    def _():
        acc_ref[...] = jnp.zeros_like(acc_ref)

    acc_ref[...] += jnp.dot(x_ref[...], w_ref[...],
                            preferred_element_type=jnp.float32)

    @pl.when(pl.program_id(2) == pl.num_programs(2) - 1)
    def _():
        out = acc_ref[...] + b_ref[...]
        if relu:
            out = jnp.maximum(out, 0.0)
        o_ref[...] = out.astype(o_ref.dtype)


def _mm_bn_res_kernel(x_ref, w_ref, b_ref, r_ref, o_ref, acc_ref):
    """Same as above + residual add + ReLU (bottleneck tail), fused.

    The residual block index does not depend on k, so it is DMA'd once per
    (i, j) output tile and only consumed in the writeback branch.
    """
    @pl.when(pl.program_id(2) == 0)
    def _():
        acc_ref[...] = jnp.zeros_like(acc_ref)

    acc_ref[...] += jnp.dot(x_ref[...], w_ref[...],
                            preferred_element_type=jnp.float32)

    @pl.when(pl.program_id(2) == pl.num_programs(2) - 1)
    def _():
        out = acc_ref[...] + b_ref[...] + r_ref[...].astype(jnp.float32)
        o_ref[...] = jnp.maximum(out, 0.0).astype(o_ref.dtype)


def _maxpool_kernel(p_ref, o_ref):
    # p_ref: (tm, KH*KW, C) window slabs -> elementwise max reduction.
    o_ref[...] = jnp.max(p_ref[...], axis=1)


def _avgpool_kernel(x_ref, o_ref):
    # x_ref: (N, H*W, C) bf16 -> f32 mean over spatial.
    o_ref[...] = jnp.mean(x_ref[...].astype(jnp.float32), axis=1)


# ---------------------------------------------------------------------------
# Tiled, pipelined fused GEMM wrapper (conv-as-GEMM + BN bias + residual/ReLU).
# ---------------------------------------------------------------------------
def _fused_matmul(xm, wm, bias, *, relu, residual=None,
                  tm=512, tn=256, tk=512):
    """xm: (M, K) bf16, wm: (K, N) bf16 (BN scale pre-folded), bias: (N,) f32."""
    m, k = xm.shape
    _, n = wm.shape

    # Tiles respect the (8, 128) layout constraint; small dims collapse to one tile.
    tm = min(tm, _round_up(m, 8))
    tn = min(tn, _round_up(n, 128))       # lane-dense outputs (pads Cout=64 -> 128)
    tk = min(tk, _round_up(k, 128))       # e.g. stem K=147 -> 256
    mp, kp, np_ = _round_up(m, tm), _round_up(k, tk), _round_up(n, tn)

    xm_p = _pad2d(xm, mp, kp)
    wm_p = _pad2d(wm, kp, np_)
    b_p = _pad2d(bias.reshape(1, n).astype(jnp.float32), 1, np_)

    grid = (mp // tm, np_ // tn, kp // tk)
    x_spec = pl.BlockSpec((tm, tk), lambda i, j, kk: (i, kk))
    w_spec = pl.BlockSpec((tk, tn), lambda i, j, kk: (kk, j))
    b_spec = pl.BlockSpec((1, tn), lambda i, j, kk: (0, j))
    o_spec = pl.BlockSpec((tm, tn), lambda i, j, kk: (i, j))

    bytes_accessed = 2 * (mp * kp + kp * np_ + mp * np_)
    if residual is not None:
        bytes_accessed += 2 * mp * np_
    cost = pl.CostEstimate(flops=2 * mp * np_ * kp, transcendentals=0,
                           bytes_accessed=bytes_accessed)
    cp = pltpu.CompilerParams(
        dimension_semantics=("parallel", "parallel", "arbitrary"),
        vmem_limit_bytes=_VMEM_LIMIT)

    if residual is None:
        out = pl.pallas_call(
            functools.partial(_mm_bn_kernel, relu=relu),
            out_shape=jax.ShapeDtypeStruct((mp, np_), jnp.bfloat16),
            grid_spec=pltpu.PrefetchScalarGridSpec(
                num_scalar_prefetch=0, grid=grid,
                in_specs=[x_spec, w_spec, b_spec],
                out_specs=o_spec,
                scratch_shapes=[pltpu.VMEM((tm, tn), jnp.float32)]),
            compiler_params=cp, cost_estimate=cost,
        )(xm_p, wm_p, b_p)
    else:
        r_p = _pad2d(residual.astype(jnp.bfloat16), mp, np_)
        r_spec = pl.BlockSpec((tm, tn), lambda i, j, kk: (i, j))
        out = pl.pallas_call(
            _mm_bn_res_kernel,
            out_shape=jax.ShapeDtypeStruct((mp, np_), jnp.bfloat16),
            grid_spec=pltpu.PrefetchScalarGridSpec(
                num_scalar_prefetch=0, grid=grid,
                in_specs=[x_spec, w_spec, b_spec, r_spec],
                out_specs=o_spec,
                scratch_shapes=[pltpu.VMEM((tm, tn), jnp.float32)]),
            compiler_params=cp, cost_estimate=cost,
        )(xm_p, wm_p, b_p, r_p)
    return out[:m, :n]


# ---------------------------------------------------------------------------
# Plain-JAX glue: im2col patch extraction (spatial convs only), layout reshapes.
# ---------------------------------------------------------------------------
def _im2col(x, kh, kw, stride, pad, pad_value=0.0):
    # x: (N, H, W, C) -> (N, Ho, Wo, kh*kw*C), patch order (i, j, c).
    if pad > 0:
        x = jnp.pad(x, ((0, 0), (pad, pad), (pad, pad), (0, 0)),
                    constant_values=pad_value)
    _, h, w, _ = x.shape
    ho = (h - kh) // stride + 1
    wo = (w - kw) // stride + 1
    cols = []
    for i in range(kh):
        for j in range(kw):
            cols.append(x[:, i:i + stride * (ho - 1) + 1:stride,
                          j:j + stride * (wo - 1) + 1:stride, :])
    return jnp.concatenate(cols, axis=-1), ho, wo


def conv_bn(x, w, scale, bias, *, stride, pad, relu, residual=None):
    """x: NHWC bf16, w: PyTorch (Cout, Cin, kh, kw) f32. Returns NHWC bf16."""
    cout, cin, kh, kw = w.shape
    n = x.shape[0]
    if kh == 1 and kw == 1:
        # 1x1 conv: no im2col; a strided slice handles stride > 1 (downsample).
        xs = x if stride == 1 else x[:, ::stride, ::stride, :]
        _, ho, wo, _ = xs.shape
        xm = xs.reshape(n * ho * wo, cin)
        wm = jnp.transpose(w.reshape(cout, cin), (1, 0))          # (Cin, Cout)
    else:
        # TODO(synk): 3x3 / 7x7 convs still materialize a bf16 im2col slab in HBM;
        # a shifted-window grid axis would remove the KH*KW read amplification.
        patches, ho, wo = _im2col(x, kh, kw, stride, pad)
        xm = patches.reshape(n * ho * wo, kh * kw * cin)
        wm = jnp.transpose(w, (2, 3, 1, 0)).reshape(kh * kw * cin, cout)
    # Fold the BN scale into the weight columns; only the bias add stays in-kernel.
    wm = (wm * scale[None, :]).astype(jnp.bfloat16)
    resm = None if residual is None else residual.reshape(n * ho * wo, cout)
    out = _fused_matmul(xm, wm, bias, relu=relu, residual=resm)
    return out.reshape(n, ho, wo, cout)


def maxpool_3x3_s2_p1(x):
    n, _, _, c = x.shape
    patches, ho, wo = _im2col(x, 3, 3, 2, 1, pad_value=-jnp.inf)
    m = n * ho * wo
    p = patches.reshape(m, 9, c)                                  # (M, 9, C)
    tm = min(512, _round_up(m, 8))
    mp = _round_up(m, tm)
    if mp != m:
        p = jnp.pad(p, ((0, mp - m), (0, 0), (0, 0)))
    out = pl.pallas_call(
        _maxpool_kernel,
        out_shape=jax.ShapeDtypeStruct((mp, c), x.dtype),
        grid_spec=pltpu.PrefetchScalarGridSpec(
            num_scalar_prefetch=0, grid=(mp // tm,),
            in_specs=[pl.BlockSpec((tm, 9, c), lambda i: (i, 0, 0))],
            out_specs=pl.BlockSpec((tm, c), lambda i: (i, 0))),
        compiler_params=pltpu.CompilerParams(
            dimension_semantics=("parallel",),
            vmem_limit_bytes=_VMEM_LIMIT),
    )(p)
    return out[:m].reshape(n, ho, wo, c)


def global_avgpool(x):
    n, h, w, c = x.shape
    xm = x.reshape(n, h * w, c)
    return pl.pallas_call(
        _avgpool_kernel,
        out_shape=jax.ShapeDtypeStruct((n, c), jnp.float32),
        grid=(1,),
        in_specs=[pl.BlockSpec((n, h * w, c), lambda i: (0, 0, 0))],
        out_specs=pl.BlockSpec((n, c), lambda i: (0, 0)),
        compiler_params=pltpu.CompilerParams(vmem_limit_bytes=_VMEM_LIMIT),
    )(xm)


# ---------------------------------------------------------------------------
# Deterministic synthetic parameters (ResNet-50 config).
# ---------------------------------------------------------------------------
_RESNET50_CFG = [(3, 64, 1), (4, 128, 2), (6, 256, 2), (3, 512, 2)]
_EXPANSION = 4


class _KeyGen:
    def __init__(self, seed):
        self._key = jax.random.PRNGKey(seed)
        self._i = 0

    def __call__(self):
        self._i += 1
        return jax.random.fold_in(self._key, self._i)


def _conv_weight(kg, cout, cin, kh, kw):
    fan_in = cin * kh * kw
    return (jax.random.normal(kg(), (cout, cin, kh, kw), jnp.float32)
            * jnp.sqrt(2.0 / fan_in))


def _bn_params(kg, c):
    gamma = jax.random.uniform(kg(), (c,), jnp.float32, 0.5, 1.5)
    beta = jax.random.normal(kg(), (c,), jnp.float32) * 0.1
    mean = jax.random.normal(kg(), (c,), jnp.float32) * 0.1
    var = jax.random.uniform(kg(), (c,), jnp.float32, 0.5, 1.5)
    scale = gamma / jnp.sqrt(var + _BN_EPS)
    bias = beta - mean * scale
    return scale, bias


def init_resnet50_params(seed=0):
    kg = _KeyGen(seed)
    params = {
        "conv1_w": _conv_weight(kg, 64, 3, 7, 7),
        "bn1": _bn_params(kg, 64),
    }
    in_c = 64
    layers = []
    for num_blocks, width, stride in _RESNET50_CFG:
        blocks = []
        for b in range(num_blocks):
            s = stride if b == 0 else 1
            out_c = width * _EXPANSION
            blk = {
                "stride": s,
                "conv1_w": _conv_weight(kg, width, in_c, 1, 1),
                "bn1": _bn_params(kg, width),
                "conv2_w": _conv_weight(kg, width, width, 3, 3),
                "bn2": _bn_params(kg, width),
                "conv3_w": _conv_weight(kg, out_c, width, 1, 1),
                "bn3": _bn_params(kg, out_c),
            }
            if s != 1 or in_c != out_c:
                blk["ds_w"] = _conv_weight(kg, out_c, in_c, 1, 1)
                blk["ds_bn"] = _bn_params(kg, out_c)
            blocks.append(blk)
            in_c = out_c
        layers.append(blocks)
    params["layers"] = layers
    return params


# ---------------------------------------------------------------------------
# Forward pass (mirrors the PyTorch module's forward()).
# ---------------------------------------------------------------------------
def _bottleneck(x, blk):
    identity = x
    s = blk["stride"]
    out = conv_bn(x, blk["conv1_w"], *blk["bn1"], stride=1, pad=0, relu=True)
    out = conv_bn(out, blk["conv2_w"], *blk["bn2"], stride=s, pad=1, relu=True)
    if "ds_w" in blk:
        identity = conv_bn(x, blk["ds_w"], *blk["ds_bn"],
                           stride=s, pad=0, relu=False)
    # conv3 + BN + residual add + ReLU fused in one Pallas kernel.
    return conv_bn(out, blk["conv3_w"], *blk["bn3"], stride=1, pad=0,
                   relu=True, residual=identity)


def resnet50_forward(x_nchw, params):
    # NCHW -> NHWC; internal activations kept in bf16 (f32 MXU accumulation).
    x = jnp.transpose(x_nchw, (0, 2, 3, 1)).astype(jnp.bfloat16)
    x = conv_bn(x, params["conv1_w"], *params["bn1"],
                stride=2, pad=3, relu=True)                       # conv1+bn1+relu
    x = maxpool_3x3_s2_p1(x)                                      # maxpool
    feature_map = []
    for blocks in params["layers"]:                               # layer1..layer4
        for blk in blocks:
            x = _bottleneck(x, blk)
        feature_map.append(
            jnp.transpose(x, (0, 3, 1, 2)).astype(jnp.float32))   # NCHW f32
    out = global_avgpool(x)           # == nn.AvgPool2d(spatial)(x).view(N, -1)
    return feature_map, out


if __name__ == "__main__":
    key = jax.random.PRNGKey(0)
    x = jax.random.normal(key, (2, 3, 32, 32), jnp.float32)  # small NCHW input
    params = init_resnet50_params(seed=0)

    feature_map, out = resnet50_forward(x, params)
    feature_map = [jax.block_until_ready(f) for f in feature_map]
    out = jax.block_until_ready(out)

    expected = [(2, 256, 8, 8), (2, 512, 4, 4), (2, 1024, 2, 2), (2, 2048, 1, 1)]
    assert [tuple(f.shape) for f in feature_map] == expected, \
        [tuple(f.shape) for f in feature_map]
    assert tuple(out.shape) == (2, 2048), out.shape
    assert all(bool(jnp.all(jnp.isfinite(f))) for f in feature_map)
    assert bool(jnp.all(jnp.isfinite(out)))
    print("KERNEL_OK")
</pallas_src>

<mosaic_0001>
module attributes {stable_mosaic.version = 11 : i64} {
  func.func @_mm_bn_kernel(%arg0: i32, %arg1: i32, %arg2: i32, %arg3: memref<512x256xbf16, #tpu.memory_space<vmem>>, %arg4: memref<256x128xbf16, #tpu.memory_space<vmem>>, %arg5: memref<1x128xf32, #tpu.memory_space<vmem>>, %arg6: memref<512x128xbf16, #tpu.memory_space<vmem>>, %arg7: memref<512x128xf32, #tpu.memory_space<vmem>>) attributes {dimension_semantics = [#tpu.dimension_semantics<parallel>, #tpu.dimension_semantics<parallel>, #tpu.dimension_semantics<arbitrary>], iteration_bounds = array<i64: 1, 1, 1>, scalar_prefetch = 0 : i64, scratch_operands = 1 : i64, tpu.core_type = #tpu.core_type<tc>, window_params = [{transform_indices = @transform_0, window_bounds = array<i64: 512, 256>}, {transform_indices = @transform_1, window_bounds = array<i64: 256, 128>}, {transform_indices = @transform_2, window_bounds = array<i64: 1, 128>}, {transform_indices = @transform_3, window_bounds = array<i64: 512, 128>}]} {
    %c0_i32 = arith.constant 0 : i32
    %0 = arith.cmpi eq, %arg2, %c0_i32 : i32
    %1 = arith.extui %0 : i1 to i32
    %c0_i32_0 = arith.constant 0 : i32
    %2 = arith.cmpi ne, %1, %c0_i32_0 : i32
    scf.if %2 {
      %cst_10 = arith.constant 0.000000e+00 : f32
      %12 = vector.broadcast %cst_10 : f32 to vector<512x128xf32>
      %c0_11 = arith.constant 0 : index
      %c0_12 = arith.constant 0 : index
      %13 = vector.load %arg7[%c0_11, %c0_12] : memref<512x128xf32, #tpu.memory_space<vmem>>, vector<512x128xf32>
      tpu.vector_store %arg7[%c0_11, %c0_12], %12 {strides = array<i32>} : memref<512x128xf32, #tpu.memory_space<vmem>>, vector<512x128xf32>,
    } else {
    }
    %c0 = arith.constant 0 : index
    %c0_1 = arith.constant 0 : index
    %3 = vector.load %arg7[%c0, %c0_1] : memref<512x128xf32, #tpu.memory_space<vmem>>, vector<512x128xf32>
    %c0_2 = arith.constant 0 : index
    %c0_3 = arith.constant 0 : index
    %4 = vector.load %arg3[%c0_2, %c0_3] : memref<512x256xbf16, #tpu.memory_space<vmem>>, vector<512x256xbf16>
    %c0_4 = arith.constant 0 : index
    %c0_5 = arith.constant 0 : index
    %5 = vector.load %arg4[%c0_4, %c0_5] : memref<256x128xbf16, #tpu.memory_space<vmem>>, vector<256x128xbf16>
    %cst = arith.constant dense<0.000000e+00> : vector<512x128xf32>
    %6 = tpu.matmul %4, %5, %cst {dimension_numbers = #tpu.dot_dimension_numbers<[1], [0], [0], [1], [0, 0, 1, 1], [], []>} : vector<512x256xbf16>, vector<256x128xbf16>, vector<512x128xf32> -> vector<512x128xf32>
    %7 = arith.addf %3, %6 : vector<512x128xf32>
    %c0_6 = arith.constant 0 : index
    %c0_7 = arith.constant 0 : index
    %8 = vector.load %arg7[%c0_6, %c0_7] : memref<512x128xf32, #tpu.memory_space<vmem>>, vector<512x128xf32>
    tpu.vector_store %arg7[%c0_6, %c0_7], %7 {strides = array<i32>} : memref<512x128xf32, #tpu.memory_space<vmem>>, vector<512x128xf32>,
    %c0_i32_8 = arith.constant 0 : i32
    %9 = arith.cmpi eq, %arg2, %c0_i32_8 : i32
    %10 = arith.extui %9 : i1 to i32
    %c0_i32_9 = arith.constant 0 : i32
    %11 = arith.cmpi ne, %10, %c0_i32_9 : i32
    scf.if %11 {
      %c0_10 = arith.constant 0 : index
      %c0_11 = arith.constant 0 : index
      %12 = vector.load %arg7[%c0_10, %c0_11] : memref<512x128xf32, #tpu.memory_space<vmem>>, vector<512x128xf32>
      %c0_12 = arith.constant 0 : index
      %c0_13 = arith.constant 0 : index
      %13 = vector.load %arg5[%c0_12, %c0_13] : memref<1x128xf32, #tpu.memory_space<vmem>>, vector<1x128xf32>
      %14 = vector.broadcast %13 : vector<1x128xf32> to vector<512x128xf32>
      %15 = arith.addf %12, %14 : vector<512x128xf32>
      %cst_14 = arith.constant 0.000000e+00 : f32
      %16 = vector.broadcast %cst_14 : f32 to vector<512x128xf32>
      %17 = arith.maximumf %15, %16 : vector<512x128xf32>
      %18 = arith.truncf %17 : vector<512x128xf32> to vector<512x128xbf16>
      %c0_15 = arith.constant 0 : index
      %c0_16 = arith.constant 0 : index
      %19 = vector.load %arg6[%c0_15, %c0_16] : memref<512x128xbf16, #tpu.memory_space<vmem>>, vector<512x128xbf16>
      tpu.vector_store %arg6[%c0_15, %c0_16], %18 {strides = array<i32>} : memref<512x128xbf16, #tpu.memory_space<vmem>>, vector<512x128xbf16>,
    } else {
    }
    return
  }
  func.func @transform_0(%arg0: i32, %arg1: i32, %arg2: i32) -> (i32, i32) {
    %c0_i32 = arith.constant 0 : i32
    return %arg0, %arg2 : i32, i32
  }
  func.func @transform_1(%arg0: i32, %arg1: i32, %arg2: i32) -> (i32, i32) {
    %c0_i32 = arith.constant 0 : i32
    return %arg2, %arg1 : i32, i32
  }
  func.func @transform_2(%arg0: i32, %arg1: i32, %arg2: i32) -> (i32, i32) {
    %c0_i32 = arith.constant 0 : i32
    %c0_i32_0 = arith.constant 0 : i32
    return %c0_i32, %arg1 : i32, i32
  }
  func.func @transform_3(%arg0: i32, %arg1: i32, %arg2: i32) -> (i32, i32) {
    %c0_i32 = arith.constant 0 : i32
    return %arg0, %arg1 : i32, i32
  }
}

</mosaic_0001>

<llo_original>
// kernel: tpu_custom_call.1
$region0: #{tpu_custom_call.1}
  #allocation0 [shape = 'u32[]', space=smem, size = 0x4, offset = 0x4, fixed_abs, tag = 'smem constant byte address 0x4 - core index']
  #allocation1 [shape = 'u32[144,128]{1,0:T(1,128)}', space=vmem, size = 0x12000, scoped, tag = 'internal scratch']
  #allocation2 [shape = 'f32[512,128]{1,0:T(8,128)}', space=vmem, size = 0x40000, scoped, tag = 'scratch operand']
  %s0 = inlined_call_operand.hbm [shape: bf16[512,256], index: 0, kind: input, shape index: {}]
  %s1 = inlined_call_operand.hbm [shape: bf16[256,128], index: 1, kind: input, shape index: {}]
  %s2 = inlined_call_operand.vmem [shape: f32[1,128], index: 2, kind: input, shape index: {}]
  %s3 = inlined_call_operand.hbm [shape: bf16[512,128], index: 3, kind: output, shape index: {}]
  %s4 = sld [smem:[#allocation0]]
  $region38: #{tpu_custom_call.1} parent=0
    _
  %s6 = ssub.s32 1, %s4
  %s7 = scalar_select 0, %s6, %s4
  $region1: #{tpu_custom_call.1} parent=0
    #allocation3 [shape = 'u8[262144]{0}', space=vmem, size = 0x40000, scoped, tag = 'input window, operand 0, single buffered']
    #allocation4 [shape = 's32[1]{0}', space=sflag, size = 0x4, scoped, tag = 'scoped memory for tpu_custom_call.1']
    #allocation5 [shape = 's32[1]{0}', space=sflag, size = 0x4, scoped, tag = 'scoped memory for tpu_custom_call.1']
    #allocation6 [shape = 'u8[65536]{0}', space=vmem, size = 0x10000, scoped, tag = 'input window, operand 1, single buffered']
    #allocation7 [shape = 's32[1]{0}', space=sflag, size = 0x4, scoped, tag = 'scoped memory for tpu_custom_call.1']
    #allocation8 [shape = 'u8[131072]{0}', space=vmem, size = 0x20000, scoped, tag = 'output window, operand 0, single buffered']
    %8 = vsyncpa [#allocation4], 0
    %9 = vsyncpa [#allocation7], 0
    %10 = vsyncpa [#allocation5], 0
    // Predicated region
    $region2: #{tpu_custom_call.1} parent=1 // pred_check
      _
    $region3: #{tpu_custom_call.1} parent=1 // pred_check_branch
      %12 = sbr.rel (0) target = $region5
    $region4: #{tpu_custom_call.1} parent=1 // pred_region
      %s14 = ssub.s32 8192, 8192
      %15 = vsyncadd [#allocation4], %s14
      %s16 = sshll.u32 [#allocation3], 4
      %s17 = int_to_ptr.vmem [resolvable:$true] %s16
      %22 = dma.hbm_to_vmem [thread:$0]  %s0, 8192, %s17, [#allocation4], 128, 128, 8
    $region5: #{tpu_custom_call.1} parent=1 // pred_fallthru
      _
    // Predicated region
    $region6: #{tpu_custom_call.1} parent=1 // pred_check
      _
    $region7: #{tpu_custom_call.1} parent=1 // pred_check_branch
      %24 = sbr.rel (0) target = $region9
    $region8: #{tpu_custom_call.1} parent=1 // pred_region
      %s26 = ssub.s32 2048, 2048
      %27 = vsyncadd [#allocation7], %s26
      %s28 = sshll.u32 [#allocation6], 4
      %s29 = int_to_ptr.vmem [resolvable:$true] %s28
      %34 = dma.hbm_to_vmem [thread:$0]  %s1, 2048, %s29, [#allocation7], 64, 64, 4
    $region9: #{tpu_custom_call.1} parent=1 // pred_fallthru
      _
    // Predicated region
    $region10: #{tpu_custom_call.1} parent=1 // pred_check
      _
    $region11: #{tpu_custom_call.1} parent=1 // pred_check_branch
      %36 = sbr.rel (0) target = $region13
    $region12: #{tpu_custom_call.1} parent=1 // pred_region
      _
    $region13: #{tpu_custom_call.1} parent=1 // pred_fallthru
      _
    // Predicated region
    $region14: #{tpu_custom_call.1} parent=1 // pred_check
      _
    $region15: #{tpu_custom_call.1} parent=1 // pred_check_branch
      %38 = sbr.rel (0) target = $region17
    $region16: #{tpu_custom_call.1} parent=1 // pred_region
      %39 = dma.done [#allocation4], 8192
    $region17: #{tpu_custom_call.1} parent=1 // pred_fallthru
      _
    // Predicated region
    $region18: #{tpu_custom_call.1} parent=1 // pred_check
      _
    $region19: #{tpu_custom_call.1} parent=1 // pred_check_branch
      %41 = sbr.rel (0) target = $region21
    $region20: #{tpu_custom_call.1} parent=1 // pred_region
      %42 = dma.done [#allocation7], 2048
    $region21: #{tpu_custom_call.1} parent=1 // pred_fallthru
      _
    %p44 = scmp.eq.s32.totalorder 0, 0
    // Predicated region
    $region22: #{tpu_custom_call.1} parent=1 // pred_check
      %p45 = pneg %p44
    $region23: #{tpu_custom_call.1} parent=1 // pred_check_branch
      %47 = sbr.rel (%p45) target = $region25
    $region24: #{tpu_custom_call.1} parent=1 // pred_region
      %48 = vst [vmem:[#allocation2] sm:$0xff] 0.0
      %49 = vst [vmem:[#allocation2 + $0x8] sm:$0xff] 0.0
      %50 = vst [vmem:[#allocation2 + $0x10] sm:$0xff] 0.0
      %51 = vst [vmem:[#allocation2 + $0x18] sm:$0xff] 0.0
      %52 = vst [vmem:[#allocation2 + $0x20] sm:$0xff] 0.0
      %53 = vst [vmem:[#allocation2 + $0x28] sm:$0xff] 0.0
      %54 = vst [vmem:[#allocation2 + $0x30] sm:$0xff] 0.0
      %55 = vst [vmem:[#allocation2 + $0x38] sm:$0xff] 0.0
      %56 = vst [vmem:[#allocation2 + $0x40] sm:$0xff] 0.0
      %57 = vst [vmem:[#allocation2 + $0x48] sm:$0xff] 0.0
      %58 = vst [vmem:[#allocation2 + $0x50] sm:$0xff] 0.0
      %59 = vst [vmem:[#allocation2 + $0x58] sm:$0xff] 0.0
      %60 = vst [vmem:[#allocation2 + $0x60] sm:$0xff] 0.0
      %61 = vst [vmem:[#allocation2 + $0x68] sm:$0xff] 0.0
      %62 = vst [vmem:[#allocation2 + $0x70] sm:$0xff] 0.0
      %63 = vst [vmem:[#allocation2 + $0x78] sm:$0xff] 0.0
      %64 = vst [vmem:[#allocation2 + $0x80] sm:$0xff] 0.0
      %65 = vst [vmem:[#allocation2 + $0x88] sm:$0xff] 0.0
      %66 = vst [vmem:[#allocation2 + $0x90] sm:$0xff] 0.0
      %67 = vst [vmem:[#allocation2 + $0x98] sm:$0xff] 0.0
      %68 = vst [vmem:[#allocation2 + $0xa0] sm:$0xff] 0.0
      %69 = vst [vmem:[#allocation2 + $0xa8] sm:$0xff] 0.0
      %70 = vst [vmem:[#allocation2 + $0xb0] sm:$0xff] 0.0
      %71 = vst [vmem:[#allocation2 + $0xb8] sm:$0xff] 0.0
      %72 = vst [vmem:[#allocation2 + $0xc0] sm:$0xff] 0.0
      %73 = vst [vmem:[#allocation2 + $0xc8] sm:$0xff] 0.0
      %74 = vst [vmem:[#allocation2 + $0xd0] sm:$0xff] 0.0
      %75 = vst [vmem:[#allocation2 + $0xd8] sm:$0xff] 0.0
      %76 = vst [vmem:[#allocation2 + $0xe0] sm:$0xff] 0.0
      %77 = vst [vmem:[#allocation2 + $0xe8] sm:$0xff] 0.0
      %78 = vst [vmem:[#allocation2 + $0xf0] sm:$0xff] 0.0
      %79 = vst [vmem:[#allocation2 + $0xf8] sm:$0xff] 0.0
      %80 = vst [vmem:[#allocation2 + $0x100] sm:$0xff] 0.0
      %81 = vst [vmem:[#allocation2 + $0x108] sm:$0xff] 0.0
      %82 = vst [vmem:[#allocation2 + $0x110] sm:$0xff] 0.0
      %83 = vst [vmem:[#allocation2 + $0x118] sm:$0xff] 0.0
      %84 = vst [vmem:[#allocation2 + $0x120] sm:$0xff] 0.0
      %85 = vst [vmem:[#allocation2 + $0x128] sm:$0xff] 0.0
      %86 = vst [vmem:[#allocation2 + $0x130] sm:$0xff] 0.0
      %87 = vst [vmem:[#allocation2 + $0x138] sm:$0xff] 0.0
      %88 = vst [vmem:[#allocation2 + $0x140] sm:$0xff] 0.0
      %89 = vst [vmem:[#allocation2 + $0x148] sm:$0xff] 0.0
      %90 = vst [vmem:[#allocation2 + $0x150] sm:$0xff] 0.0
      %91 = vst [vmem:[#allocation2 + $0x158] sm:$0xff] 0.0
      %92 = vst [vmem:[#allocation2 + $0x160] sm:$0xff] 0.0
      %93 = vst [vmem:[#allocation2 + $0x168] sm:$0xff] 0.0
      %94 = vst [vmem:[#allocation2 + $0x170] sm:$0xff] 0.0
      %95 = vst [vmem:[#allocation2 + $0x178] sm:$0xff] 0.0
      %96 = vst [vmem:[#allocation2 + $0x180] sm:$0xff] 0.0
      %97 = vst [vmem:[#allocation2 + $0x188] sm:$0xff] 0.0
      %98 = vst [vmem:[#allocation2 + $0x190] sm:$0xff] 0.0
      %99 = vst [vmem:[#allocation2 + $0x198] sm:$0xff] 0.0
      %100 = vst [vmem:[#allocation2 + $0x1a0] sm:$0xff] 0.0
      %101 = vst [vmem:[#allocation2 + $0x1a8] sm:$0xff] 0.0
      %102 = vst [vmem:[#allocation2 + $0x1b0] sm:$0xff] 0.0
      %103 = vst [vmem:[#allocation2 + $0x1b8] sm:$0xff] 0.0
      %104 = vst [vmem:[#allocation2 + $0x1c0] sm:$0xff] 0.0
      %105 = vst [vmem:[#allocation2 + $0x1c8] sm:$0xff] 0.0
      %106 = vst [vmem:[#allocation2 + $0x1d0] sm:$0xff] 0.0
      %107 = vst [vmem:[#allocation2 + $0x1d8] sm:$0xff] 0.0
      %108 = vst [vmem:[#allocation2 + $0x1e0] sm:$0xff] 0.0
      %109 = vst [vmem:[#allocation2 + $0x1e8] sm:$0xff] 0.0
      %110 = vst [vmem:[#allocation2 + $0x1f0] sm:$0xff] 0.0
      %111 = vst [vmem:[#allocation2 + $0x1f8] sm:$0xff] 0.0
    $region25: #{tpu_custom_call.1} parent=1 // pred_fallthru
      _
    %v112 = vld [vmem:[#allocation2] sm:$0xff]
    %v113 = vld [vmem:[#allocation2 + $0x8] sm:$0xff]
    %v114 = vld [vmem:[#allocation2 + $0x10] sm:$0xff]
    %v115 = vld [vmem:[#allocation2 + $0x18] sm:$0xff]
    %v116 = vld [vmem:[#allocation2 + $0x20] sm:$0xff]
    %v117 = vld [vmem:[#allocation2 + $0x28] sm:$0xff]
    %v118 = vld [vmem:[#allocation2 + $0x30] sm:$0xff]
    %v119 = vld [vmem:[#allocation2 + $0x38] sm:$0xff]
    %v120 = vld [vmem:[#allocation2 + $0x40] sm:$0xff]
    %v121 = vld [vmem:[#allocation2 + $0x48] sm:$0xff]
    %v122 = vld [vmem:[#allocation2 + $0x50] sm:$0xff]
    %v123 = vld [vmem:[#allocation2 + $0x58] sm:$0xff]
    %v124 = vld [vmem:[#allocation2 + $0x60] sm:$0xff]
    %v125 = vld [vmem:[#allocation2 + $0x68] sm:$0xff]
    %v126 = vld [vmem:[#allocation2 + $0x70] sm:$0xff]
    %v127 = vld [vmem:[#allocation2 + $0x78] sm:$0xff]
    %v128 = vld [vmem:[#allocation2 + $0x80] sm:$0xff]
    %v129 = vld [vmem:[#allocation2 + $0x88] sm:$0xff]
    %v130 = vld [vmem:[#allocation2 + $0x90] sm:$0xff]
    %v131 = vld [vmem:[#allocation2 + $0x98] sm:$0xff]
    %v132 = vld [vmem:[#allocation2 + $0xa0] sm:$0xff]
    %v133 = vld [vmem:[#allocation2 + $0xa8] sm:$0xff]
    %v134 = vld [vmem:[#allocation2 + $0xb0] sm:$0xff]
    %v135 = vld [vmem:[#allocation2 + $0xb8] sm:$0xff]
    %v136 = vld [vmem:[#allocation2 + $0xc0] sm:$0xff]
    %v137 = vld [vmem:[#allocation2 + $0xc8] sm:$0xff]
    %v138 = vld [vmem:[#allocation2 + $0xd0] sm:$0xff]
    %v139 = vld [vmem:[#allocation2 + $0xd8] sm:$0xff]
    %v140 = vld [vmem:[#allocation2 + $0xe0] sm:$0xff]
    %v141 = vld [vmem:[#allocation2 + $0xe8] sm:$0xff]
    %v142 = vld [vmem:[#allocation2 + $0xf0] sm:$0xff]
    %v143 = vld [vmem:[#allocation2 + $0xf8] sm:$0xff]
    %v144 = vld [vmem:[#allocation2 + $0x100] sm:$0xff]
    %v145 = vld [vmem:[#allocation2 + $0x108] sm:$0xff]
    %v146 = vld [vmem:[#allocation2 + $0x110] sm:$0xff]
    %v147 = vld [vmem:[#allocation2 + $0x118] sm:$0xff]
    %v148 = vld [vmem:[#allocation2 + $0x120] sm:$0xff]
    %v149 = vld [vmem:[#allocation2 + $0x128] sm:$0xff]
    %v150 = vld [vmem:[#allocation2 + $0x130] sm:$0xff]
    %v151 = vld [vmem:[#allocation2 + $0x138] sm:$0xff]
    %v152 = vld [vmem:[#allocation2 + $0x140] sm:$0xff]
    %v153 = vld [vmem:[#allocation2 + $0x148] sm:$0xff]
    %v154 = vld [vmem:[#allocation2 + $0x150] sm:$0xff]
    %v155 = vld [vmem:[#allocation2 + $0x158] sm:$0xff]
    %v156 = vld [vmem:[#allocation2 + $0x160] sm:$0xff]
    %v157 = vld [vmem:[#allocation2 + $0x168] sm:$0xff]
    %v158 = vld [vmem:[#allocation2 + $0x170] sm:$0xff]
    %v159 = vld [vmem:[#allocation2 + $0x178] sm:$0xff]
    %v160 = vld [vmem:[#allocation2 + $0x180] sm:$0xff]
    %v161 = vld [vmem:[#allocation2 + $0x188] sm:$0xff]
    %v162 = vld [vmem:[#allocation2 + $0x190] sm:$0xff]
    %v163 = vld [vmem:[#allocation2 + $0x198] sm:$0xff]
    %v164 = vld [vmem:[#allocation2 + $0x1a0] sm:$0xff]
    %v165 = vld [vmem:[#allocation2 + $0x1a8] sm:$0xff]
    %v166 = vld [vmem:[#allocation2 + $0x1b0] sm:$0xff]
    %v167 = vld [vmem:[#allocation2 + $0x1b8] sm:$0xff]
    %v168 = vld [vmem:[#allocation2 + $0x1c0] sm:$0xff]
    %v169 = vld [vmem:[#allocation2 + $0x1c8] sm:$0xff]
    %v170 = vld [vmem:[#allocation2 + $0x1d0] sm:$0xff]
    %v171 = vld [vmem:[#allocation2 + $0x1d8] sm:$0xff]
    %v172 = vld [vmem:[#allocation2 + $0x1e0] sm:$0xff]
    %v173 = vld [vmem:[#allocation2 + $0x1e8] sm:$0xff]
    %v174 = vld [vmem:[#allocation2 + $0x1f0] sm:$0xff]
    %v175 = vld [vmem:[#allocation2 + $0x1f8] sm:$0xff]
    %v176 = vld [vmem:[#allocation3] sm:$0xff]
    %v177 = vld [vmem:[#allocation3 + $0x8] sm:$0xff]
    %v178 = vld [vmem:[#allocation3 + $0x10] sm:$0xff]
    %v179 = vld [vmem:[#allocation3 + $0x18] sm:$0xff]
    %v180 = vld [vmem:[#allocation3 + $0x20] sm:$0xff]
    %v181 = vld [vmem:[#allocation3 + $0x28] sm:$0xff]
    %v182 = vld [vmem:[#allocation3 + $0x30] sm:$0xff]
    %v183 = vld [vmem:[#allocation3 + $0x38] sm:$0xff]
    %v184 = vld [vmem:[#allocation3 + $0x40] sm:$0xff]
    %v185 = vld [vmem:[#allocation3 + $0x48] sm:$0xff]
    %v186 = vld [vmem:[#allocation3 + $0x50] sm:$0xff]
    %v187 = vld [vmem:[#allocation3 + $0x58] sm:$0xff]
    %v188 = vld [vmem:[#allocation3 + $0x60] sm:$0xff]
    %v189 = vld [vmem:[#allocation3 + $0x68] sm:$0xff]
    %v190 = vld [vmem:[#allocation3 + $0x70] sm:$0xff]
    %v191 = vld [vmem:[#allocation3 + $0x78] sm:$0xff]
    %v192 = vld [vmem:[#allocation3 + $0x80] sm:$0xff]
    %v193 = vld [vmem:[#allocation3 + $0x88] sm:$0xff]
    %v194 = vld [vmem:[#allocation3 + $0x90] sm:$0xff]
    %v195 = vld [vmem:[#allocation3 + $0x98] sm:$0xff]
    %v196 = vld [vmem:[#allocation3 + $0xa0] sm:$0xff]
    %v197 = vld [vmem:[#allocation3 + $0xa8] sm:$0xff]
    %v198 = vld [vmem:[#allocation3 + $0xb0] sm:$0xff]
    %v199 = vld [vmem:[#allocation3 + $0xb8] sm:$0xff]
    %v200 = vld [vmem:[#allocation3 + $0xc0] sm:$0xff]
    %v201 = vld [vmem:[#allocation3 + $0xc8] sm:$0xff]
    %v202 = vld [vmem:[#allocation3 + $0xd0] sm:$0xff]
    %v203 = vld [vmem:[#allocation3 + $0xd8] sm:$0xff]
    %v204 = vld [vmem:[#allocation3 + $0xe0] sm:$0xff]
    %v205 = vld [vmem:[#allocation3 + $0xe8] sm:$0xff]
    %v206 = vld [vmem:[#allocation3 + $0xf0] sm:$0xff]
    %v207 = vld [vmem:[#allocation3 + $0xf8] sm:$0xff]
    %v208 = vld [vmem:[#allocation3 + $0x100] sm:$0xff]
    %v209 = vld [vmem:[#allocation3 + $0x108] sm:$0xff]
    %v210 = vld [vmem:[#allocation3 + $0x110] sm:$0xff]
    %v211 = vld [vmem:[#allocation3 + $0x118] sm:$0xff]
    %v212 = vld [vmem:[#allocation3 + $0x120] sm:$0xff]
    %v213 = vld [vmem:[#allocation3 + $0x128] sm:$0xff]
    %v214 = vld [vmem:[#allocation3 + $0x130] sm:$0xff]
    %v215 = vld [vmem:[#allocation3 + $0x138] sm:$0xff]
    %v216 = vld [vmem:[#allocation3 + $0x140] sm:$0xff]
    %v217 = vld [vmem:[#allocation3 + $0x148] sm:$0xff]
    %v218 = vld [vmem:[#allocation3 + $0x150] sm:$0xff]
    %v219 = vld [vmem:[#allocation3 + $0x158] sm:$0xff]
    %v220 = vld [vmem:[#allocation3 + $0x160] sm:$0xff]
    %v221 = vld [vmem:[#allocation3 + $0x168] sm:$0xff]
    %v222 = vld [vmem:[#allocation3 + $0x170] sm:$0xff]
    %v223 = vld [vmem:[#allocation3 + $0x178] sm:$0xff]
    %v224 = vld [vmem:[#allocation3 + $0x180] sm:$0xff]
    %v225 = vld [vmem:[#allocation3 + $0x188] sm:$0xff]
    %v226 = vld [vmem:[#allocation3 + $0x190] sm:$0xff]
    %v227 = vld [vmem:[#allocation3 + $0x198] sm:$0xff]
    %v228 = vld [vmem:[#allocation3 + $0x1a0] sm:$0xff]
    %v229 = vld [vmem:[#allocation3 + $0x1a8] sm:$0xff]
    %v230 = vld [vmem:[#allocation3 + $0x1b0] sm:$0xff]
    %v231 = vld [vmem:[#allocation3 + $0x1b8] sm:$0xff]
    %v232 = vld [vmem:[#allocation3 + $0x1c0] sm:$0xff]
    %v233 = vld [vmem:[#allocation3 + $0x1c8] sm:$0xff]
    %v234 = vld [vmem:[#allocation3 + $0x1d0] sm:$0xff]
    %v235 = vld [vmem:[#allocation3 + $0x1d8] sm:$0xff]
    %v236 = vld [vmem:[#allocation3 + $0x1e0] sm:$0xff]
    %v237 = vld [vmem:[#allocation3 + $0x1e8] sm:$0xff]
    %v238 = vld [vmem:[#allocation3 + $0x1f0] sm:$0xff]
    %v239 = vld [vmem:[#allocation3 + $0x1f8] sm:$0xff]
    %v240 = vld [vmem:[#allocation6] sm:$0xf]
    %v241 = vld [vmem:[#allocation6 + $0x4] sm:$0xf]
    %v242 = vld [vmem:[#allocation6 + $0x8] sm:$0xf]
    %v243 = vld [vmem:[#allocation6 + $0xc] sm:$0xf]
    %v244 = vld [vmem:[#allocation6 + $0x10] sm:$0xf]
    %v245 = vld [vmem:[#allocation6 + $0x14] sm:$0xf]
    %v246 = vld [vmem:[#allocation6 + $0x18] sm:$0xf]
    %v247 = vld [vmem:[#allocation6 + $0x1c] sm:$0xf]
    %v248 = vld [vmem:[#allocation6 + $0x20] sm:$0xf]
    %v249 = vld [vmem:[#allocation6 + $0x24] sm:$0xf]
    %v250 = vld [vmem:[#allocation6 + $0x28] sm:$0xf]
    %v251 = vld [vmem:[#allocation6 + $0x2c] sm:$0xf]
    %v252 = vld [vmem:[#allocation6 + $0x30] sm:$0xf]
    %v253 = vld [vmem:[#allocation6 + $0x34] sm:$0xf]
    %v254 = vld [vmem:[#allocation6 + $0x38] sm:$0xf]
    %v255 = vld [vmem:[#allocation6 + $0x3c] sm:$0xf]
    %v256 = vld [vmem:[#allocation6 + $0x40] sm:$0xf]
    %v257 = vld [vmem:[#allocation6 + $0x44] sm:$0xf]
    %v258 = vld [vmem:[#allocation6 + $0x48] sm:$0xf]
    %v259 = vld [vmem:[#allocation6 + $0x4c] sm:$0xf]
    %v260 = vld [vmem:[#allocation6 + $0x50] sm:$0xf]
    %v261 = vld [vmem:[#allocation6 + $0x54] sm:$0xf]
    %v262 = vld [vmem:[#allocation6 + $0x58] sm:$0xf]
    %v263 = vld [vmem:[#allocation6 + $0x5c] sm:$0xf]
    %v264 = vld [vmem:[#allocation6 + $0x60] sm:$0xf]
    %v265 = vld [vmem:[#allocation6 + $0x64] sm:$0xf]
    %v266 = vld [vmem:[#allocation6 + $0x68] sm:$0xf]
    %v267 = vld [vmem:[#allocation6 + $0x6c] sm:$0xf]
    %v268 = vld [vmem:[#allocation6 + $0x70] sm:$0xf]
    %v269 = vld [vmem:[#allocation6 + $0x74] sm:$0xf]
    %v270 = vld [vmem:[#allocation6 + $0x78] sm:$0xf]
    %v271 = vld [vmem:[#allocation6 + $0x7c] sm:$0xf]
    %v336 = vunpack.c.l.b16 %v176
    %v337 = vunpack.c.h.b16 %v176
    %v338 = vunpack.c.l.b16 %v177
    %v339 = vunpack.c.h.b16 %v177
    %v340 = vunpack.c.l.b16 %v178
    %v341 = vunpack.c.h.b16 %v178
    %v342 = vunpack.c.l.b16 %v179
    %v343 = vunpack.c.h.b16 %v179
    %v344 = vunpack.c.l.b16 %v180
    %v345 = vunpack.c.h.b16 %v180
    %v346 = vunpack.c.l.b16 %v181
    %v347 = vunpack.c.h.b16 %v181
    %v348 = vunpack.c.l.b16 %v182
    %v349 = vunpack.c.h.b16 %v182
    %v350 = vunpack.c.l.b16 %v183
    %v351 = vunpack.c.h.b16 %v183
    %v352 = vunpack.c.l.b16 %v184
    %v353 = vunpack.c.h.b16 %v184
    %v354 = vunpack.c.l.b16 %v185
    %v355 = vunpack.c.h.b16 %v185
    %v356 = vunpack.c.l.b16 %v186
    %v357 = vunpack.c.h.b16 %v186
    %v358 = vunpack.c.l.b16 %v187
    %v359 = vunpack.c.h.b16 %v187
    %v360 = vunpack.c.l.b16 %v188
    %v361 = vunpack.c.h.b16 %v188
    %v362 = vunpack.c.l.b16 %v189
    %v363 = vunpack.c.h.b16 %v189
    %v364 = vunpack.c.l.b16 %v190
    %v365 = vunpack.c.h.b16 %v190
    %v366 = vunpack.c.l.b16 %v191
    %v367 = vunpack.c.h.b16 %v191
    %v368 = vunpack.c.l.b16 %v192
    %v369 = vunpack.c.h.b16 %v192
    %v370 = vunpack.c.l.b16 %v193
    %v371 = vunpack.c.h.b16 %v193
    %v372 = vunpack.c.l.b16 %v194
    %v373 = vunpack.c.h.b16 %v194
    %v374 = vunpack.c.l.b16 %v195
    %v375 = vunpack.c.h.b16 %v195
    %v376 = vunpack.c.l.b16 %v196
    %v377 = vunpack.c.h.b16 %v196
    %v378 = vunpack.c.l.b16 %v197
    %v379 = vunpack.c.h.b16 %v197
    %v380 = vunpack.c.l.b16 %v198
    %v381 = vunpack.c.h.b16 %v198
    %v382 = vunpack.c.l.b16 %v199
    %v383 = vunpack.c.h.b16 %v199
    %v384 = vunpack.c.l.b16 %v200
    %v385 = vunpack.c.h.b16 %v200
    %v386 = vunpack.c.l.b16 %v201
    %v387 = vunpack.c.h.b16 %v201
    %v388 = vunpack.c.l.b16 %v202
    %v389 = vunpack.c.h.b16 %v202
    %v390 = vunpack.c.l.b16 %v203
    %v391 = vunpack.c.h.b16 %v203
    %v392 = vunpack.c.l.b16 %v204
    %v393 = vunpack.c.h.b16 %v204
    %v394 = vunpack.c.l.b16 %v205
    %v395 = vunpack.c.h.b16 %v205
    %v396 = vunpack.c.l.b16 %v206
    %v397 = vunpack.c.h.b16 %v206
    %v398 = vunpack.c.l.b16 %v207
    %v399 = vunpack.c.h.b16 %v207
    %v400 = vunpack.c.l.b16 %v208
    %v401 = vunpack.c.h.b16 %v208
    %v402 = vunpack.c.l.b16 %v209
    %v403 = vunpack.c.h.b16 %v209
    %v404 = vunpack.c.l.b16 %v210
    %v405 = vunpack.c.h.b16 %v210
    %v406 = vunpack.c.l.b16 %v211
    %v407 = vunpack.c.h.b16 %v211
    %v408 = vunpack.c.l.b16 %v212
    %v409 = vunpack.c.h.b16 %v212
    %v410 = vunpack.c.l.b16 %v213
    %v411 = vunpack.c.h.b16 %v213
    %v412 = vunpack.c.l.b16 %v214
    %v413 = vunpack.c.h.b16 %v214
    %v414 = vunpack.c.l.b16 %v215
    %v415 = vunpack.c.h.b16 %v215
    %v416 = vunpack.c.l.b16 %v216
    %v417 = vunpack.c.h.b16 %v216
    %v418 = vunpack.c.l.b16 %v217
    %v419 = vunpack.c.h.b16 %v217
    %v420 = vunpack.c.l.b16 %v218
    %v421 = vunpack.c.h.b16 %v218
    %v422 = vunpack.c.l.b16 %v219
    %v423 = vunpack.c.h.b16 %v219
    %v424 = vunpack.c.l.b16 %v220
    %v425 = vunpack.c.h.b16 %v220
    %v426 = vunpack.c.l.b16 %v221
    %v427 = vunpack.c.h.b16 %v221
    %v428 = vunpack.c.l.b16 %v222
    %v429 = vunpack.c.h.b16 %v222
    %v430 = vunpack.c.l.b16 %v223
    %v431 = vunpack.c.h.b16 %v223
    %v432 = vunpack.c.l.b16 %v224
    %v433 = vunpack.c.h.b16 %v224
    %v434 = vunpack.c.l.b16 %v225
    %v435 = vunpack.c.h.b16 %v225
    %v436 = vunpack.c.l.b16 %v226
    %v437 = vunpack.c.h.b16 %v226
    %v438 = vunpack.c.l.b16 %v227
    %v439 = vunpack.c.h.b16 %v227
    %v440 = vunpack.c.l.b16 %v228
    %v441 = vunpack.c.h.b16 %v228
    %v442 = vunpack.c.l.b16 %v229
    %v443 = vunpack.c.h.b16 %v229
    %v444 = vunpack.c.l.b16 %v230
    %v445 = vunpack.c.h.b16 %v230
    %v446 = vunpack.c.l.b16 %v231
    %v447 = vunpack.c.h.b16 %v231
    %v448 = vunpack.c.l.b16 %v232
    %v449 = vunpack.c.h.b16 %v232
    %v450 = vunpack.c.l.b16 %v233
    %v451 = vunpack.c.h.b16 %v233
    %v452 = vunpack.c.l.b16 %v234
    %v453 = vunpack.c.h.b16 %v234
    %v454 = vunpack.c.l.b16 %v235
    %v455 = vunpack.c.h.b16 %v235
    %v456 = vunpack.c.l.b16 %v236
    %v457 = vunpack.c.h.b16 %v236
    %v458 = vunpack.c.l.b16 %v237
    %v459 = vunpack.c.h.b16 %v237
    %v460 = vunpack.c.l.b16 %v238
    %v461 = vunpack.c.h.b16 %v238
    %v462 = vunpack.c.l.b16 %v239
    %v463 = vunpack.c.h.b16 %v239
    %v464 = vpack.c.b16 %v338, %v336
    %v465 = vpack.c.b16 %v339, %v337
    %v466 = vpack.c.b16 %v342, %v340
    %v467 = vpack.c.b16 %v343, %v341
    %v468 = vpack.c.b16 %v346, %v344
    %v469 = vpack.c.b16 %v347, %v345
    %v470 = vpack.c.b16 %v350, %v348
    %v471 = vpack.c.b16 %v351, %v349
    %v472 = vpack.c.b16 %v354, %v352
    %v473 = vpack.c.b16 %v355, %v353
    %v474 = vpack.c.b16 %v358, %v356
    %v475 = vpack.c.b16 %v359, %v357
    %v476 = vpack.c.b16 %v362, %v360
    %v477 = vpack.c.b16 %v363, %v361
    %v478 = vpack.c.b16 %v366, %v364
    %v479 = vpack.c.b16 %v367, %v365
    %v480 = vpack.c.b16 %v370, %v368
    %v481 = vpack.c.b16 %v371, %v369
    %v482 = vpack.c.b16 %v374, %v372
    %v483 = vpack.c.b16 %v375, %v373
    %v484 = vpack.c.b16 %v378, %v376
    %v485 = vpack.c.b16 %v379, %v377
    %v486 = vpack.c.b16 %v382, %v380
    %v487 = vpack.c.b16 %v383, %v381
    %v488 = vpack.c.b16 %v386, %v384
    %v489 = vpack.c.b16 %v387, %v385
    %v490 = vpack.c.b16 %v390, %v388
    %v491 = vpack.c.b16 %v391, %v389
    %v492 = vpack.c.b16 %v394, %v392
    %v493 = vpack.c.b16 %v395, %v393
    %v494 = vpack.c.b16 %v398, %v396
    %v495 = vpack.c.b16 %v399, %v397
    %v496 = vpack.c.b16 %v402, %v400
    %v497 = vpack.c.b16 %v403, %v401
    %v498 = vpack.c.b16 %v406, %v404
    %v499 = vpack.c.b16 %v407, %v405
    %v500 = vpack.c.b16 %v410, %v408
    %v501 = vpack.c.b16 %v411, %v409
    %v502 = vpack.c.b16 %v414, %v412
    %v503 = vpack.c.b16 %v415, %v413
    %v504 = vpack.c.b16 %v418, %v416
    %v505 = vpack.c.b16 %v419, %v417
    %v506 = vpack.c.b16 %v422, %v420
    %v507 = vpack.c.b16 %v423, %v421
    %v508 = vpack.c.b16 %v426, %v424
    %v509 = vpack.c.b16 %v427, %v425
    %v510 = vpack.c.b16 %v430, %v428
    %v511 = vpack.c.b16 %v431, %v429
    %v512 = vpack.c.b16 %v434, %v432
    %v513 = vpack.c.b16 %v435, %v433
    %v514 = vpack.c.b16 %v438, %v436
    %v515 = vpack.c.b16 %v439, %v437
    %v516 = vpack.c.b16 %v442, %v440
    %v517 = vpack.c.b16 %v443, %v441
    %v518 = vpack.c.b16 %v446, %v444
    %v519 = vpack.c.b16 %v447, %v445
    %v520 = vpack.c.b16 %v450, %v448
    %v521 = vpack.c.b16 %v451, %v449
    %v522 = vpack.c.b16 %v454, %v452
    %v523 = vpack.c.b16 %v455, %v453
    %v524 = vpack.c.b16 %v458, %v456
    %v525 = vpack.c.b16 %v459, %v457
    %v526 = vpack.c.b16 %v462, %v460
    %v527 = vpack.c.b16 %v463, %v461
    %v624 = vunpack.c.l.b16 %v240
    %v625 = vunpack.c.l.b16 %v241
    %v626 = vunpack.c.l.b16 %v242
    %v627 = vunpack.c.l.b16 %v243
    %v628 = vunpack.c.l.b16 %v244
    %v629 = vunpack.c.l.b16 %v245
    %v630 = vunpack.c.l.b16 %v246
    %v631 = vunpack.c.l.b16 %v247
    %v632 = vunpack.c.l.b16 %v248
    %v633 = vunpack.c.l.b16 %v249
    %v634 = vunpack.c.l.b16 %v250
    %v635 = vunpack.c.l.b16 %v251
    %v636 = vunpack.c.l.b16 %v252
    %v637 = vunpack.c.l.b16 %v253
    %v638 = vunpack.c.l.b16 %v254
    %v639 = vunpack.c.l.b16 %v255
    %v640 = vunpack.c.l.b16 %v256
    %v641 = vunpack.c.l.b16 %v257
    %v642 = vunpack.c.l.b16 %v258
    %v643 = vunpack.c.l.b16 %v259
    %v644 = vunpack.c.l.b16 %v260
    %v645 = vunpack.c.l.b16 %v261
    %v646 = vunpack.c.l.b16 %v262
    %v647 = vunpack.c.l.b16 %v263
    %v648 = vunpack.c.l.b16 %v264
    %v649 = vunpack.c.l.b16 %v265
    %v650 = vunpack.c.l.b16 %v266
    %v651 = vunpack.c.l.b16 %v267
    %v652 = vunpack.c.l.b16 %v268
    %v653 = vunpack.c.l.b16 %v269
    %v654 = vunpack.c.l.b16 %v270
    %v655 = vunpack.c.l.b16 %v271
    %v656 = vpack.c.b16 %v625, %v624
    %v657 = vpack.c.b16 %v627, %v626
    %v658 = vpack.c.b16 %v629, %v628
    %v659 = vpack.c.b16 %v631, %v630
    %v660 = vpack.c.b16 %v633, %v632
    %v661 = vpack.c.b16 %v635, %v634
    %v662 = vpack.c.b16 %v637, %v636
    %v663 = vpack.c.b16 %v639, %v638
    %v664 = vpack.c.b16 %v641, %v640
    %v665 = vpack.c.b16 %v643, %v642
    %v666 = vpack.c.b16 %v645, %v644
    %v667 = vpack.c.b16 %v647, %v646
    %v668 = vpack.c.b16 %v649, %v648
    %v669 = vpack.c.b16 %v651, %v650
    %v670 = vpack.c.b16 %v653, %v652
    %v671 = vpack.c.b16 %v655, %v654
    %688 = vmatprep.subr.bf16.mxu0 0
    %689 = vmatpush1.bf16.msra.mxu0 %v656
    %690 = vmatprep.subr.bf16.mxu0 0
    %691 = vmatpush1.bf16.msra.mxu0 %v657
    %692 = vmatprep.subr.bf16.mxu0 0
    %693 = vmatpush1.bf16.msra.mxu0 %v658
    %694 = vmatprep.subr.bf16.mxu0 0
    %695 = vmatpush1.bf16.msra.mxu0 %v659
    %696 = vmatprep.subr.bf16.mxu0 0
    %697 = vmatpush1.bf16.msra.mxu0 %v660
    %698 = vmatprep.subr.bf16.mxu0 0
    %699 = vmatpush1.bf16.msra.mxu0 %v661
    %700 = vmatprep.subr.bf16.mxu0 0
    %701 = vmatpush1.bf16.msra.mxu0 %v662
    %702 = vmatprep.subr.bf16.mxu0 0
    %703 = vmatpush1.bf16.msra.mxu0 %v663
    %704 = vmatprep.subr.bf16.mxu0 0
    %705 = vmatpush1.bf16.msra.mxu0 %v664
    %706 = vmatprep.subr.bf16.mxu0 0
    %707 = vmatpush1.bf16.msra.mxu0 %v665
    %708 = vmatprep.subr.bf16.mxu0 0
    %709 = vmatpush1.bf16.msra.mxu0 %v666
    %710 = vmatprep.subr.bf16.mxu0 0
    %711 = vmatpush1.bf16.msra.mxu0 %v667
    %712 = vmatprep.subr.bf16.mxu0 0
    %713 = vmatpush1.bf16.msra.mxu0 %v668
    %714 = vmatprep.subr.bf16.mxu0 0
    %715 = vmatpush1.bf16.msra.mxu0 %v669
    %716 = vmatprep.subr.bf16.mxu0 0
    %717 = vmatpush1.bf16.msra.mxu0 %v670
    %718 = vmatprep.subr.bf16.mxu0 0
    %719 = vmatpush1.bf16.msra.mxu0 %v671
    %720 = vmatprep.mubr.bf16.mxu0 %v465
    %721 = vmatmul.mubr.bf16.gmra.mrb[0].mxu0 %v464
    %v722 = vpop.f32.mrb[0].mxu0
    %v723 = vadd.f32 0.0, %v722
    %v724 = vpop.f32.mrb[0].mxu0
    %v725 = vpop.f32.mrb[0].mxu0
    %v726 = vadd.f32 0.0, %v725
    %v727 = vpop.f32.mrb[0].mxu0
    %728 = vmatprep.mubr.bf16.mxu0 %v467
    %729 = vmatmul.mubr.bf16.gmra.mrb[0].mxu0 %v466
    %v730 = vpop.f32.mrb[0].mxu0
    %v731 = vadd.f32 0.0, %v730
    %v732 = vpop.f32.mrb[0].mxu0
    %v733 = vpop.f32.mrb[0].mxu0
    %v734 = vadd.f32 0.0, %v733
    %v735 = vpop.f32.mrb[0].mxu0
    %736 = vmatprep.mubr.bf16.mxu0 %v469
    %737 = vmatmul.mubr.bf16.gmra.mrb[0].mxu0 %v468
    %v738 = vpop.f32.mrb[0].mxu0
    %v739 = vadd.f32 0.0, %v738
    %v740 = vpop.f32.mrb[0].mxu0
    %v741 = vpop.f32.mrb[0].mxu0
    %v742 = vadd.f32 0.0, %v741
    %v743 = vpop.f32.mrb[0].mxu0
    %744 = vmatprep.mubr.bf16.mxu0 %v471
    %745 = vmatmul.mubr.bf16.gmra.mrb[0].mxu0 %v470
    %v746 = vpop.f32.mrb[0].mxu0
    %v747 = vadd.f32 0.0, %v746
    %v748 = vpop.f32.mrb[0].mxu0
    %v749 = vpop.f32.mrb[0].mxu0
    %v750 = vadd.f32 0.0, %v749
    %v751 = vpop.f32.mrb[0].mxu0
    %752 = vmatprep.mubr.bf16.mxu0 %v473
    %753 = vmatmul.mubr.bf16.gmra.mrb[0].mxu0 %v472
    %v754 = vpop.f32.mrb[0].mxu0
    %v755 = vadd.f32 0.0, %v754
    %v756 = vpop.f32.mrb[0].mxu0
    %v757 = vpop.f32.mrb[0].mxu0
    %v758 = vadd.f32 0.0, %v757
    %v759 = vpop.f32.mrb[0].mxu0
    %760 = vmatprep.mubr.bf16.mxu0 %v475
    %761 = vmatmul.mubr.bf16.gmra.mrb[0].mxu0 %v474
    %v762 = vpop.f32.mrb[0].mxu0
    %v763 = vadd.f32 0.0, %v762
    %v764 = vpop.f32.mrb[0].mxu0
    %v765 = vpop.f32.mrb[0].mxu0
    %v766 = vadd.f32 0.0, %v765
    %v767 = vpop.f32.mrb[0].mxu0
    %768 = vmatprep.mubr.bf16.mxu0 %v477
    %769 = vmatmul.mubr.bf16.gmra.mrb[0].mxu0 %v476
    %v770 = vpop.f32.mrb[0].mxu0
    %v771 = vadd.f32 0.0, %v770
    %v772 = vpop.f32.mrb[0].mxu0
    %v773 = vpop.f32.mrb[0].mxu0
    %v774 = vadd.f32 0.0, %v773
    %v775 = vpop.f32.mrb[0].mxu0
    %776 = vmatprep.mubr.bf16.mxu0 %v479
    %777 = vmatmul.mubr.bf16.gmra.mrb[0].mxu0 %v478
    %v778 = vpop.f32.mrb[0].mxu0
    %v779 = vadd.f32 0.0, %v778
    %v780 = vpop.f32.mrb[0].mxu0
    %v781 = vpop.f32.mrb[0].mxu0
    %v782 = vadd.f32 0.0, %v781
    %v783 = vpop.f32.mrb[0].mxu0
    %784 = vmatprep.mubr.bf16.mxu0 %v481
    %785 = vmatmul.mubr.bf16.gmra.mrb[0].mxu0 %v480
    %v786 = vpop.f32.mrb[0].mxu0
    %v787 = vadd.f32 0.0, %v786
    %v788 = vpop.f32.mrb[0].mxu0
    %v789 = vpop.f32.mrb[0].mxu0
    %v790 = vadd.f32 0.0, %v789
    %v791 = vpop.f32.mrb[0].mxu0
    %792 = vmatprep.mubr.bf16.mxu0 %v483
    %793 = vmatmul.mubr.bf16.gmra.mrb[0].mxu0 %v482
    %v794 = vpop.f32.mrb[0].mxu0
    %v795 = vadd.f32 0.0, %v794
    %v796 = vpop.f32.mrb[0].mxu0
    %v797 = vpop.f32.mrb[0].mxu0
    %v798 = vadd.f32 0.0, %v797
    %v799 = vpop.f32.mrb[0].mxu0
    %800 = vmatprep.mubr.bf16.mxu0 %v485
    %801 = vmatmul.mubr.bf16.gmra.mrb[0].mxu0 %v484
    %v802 = vpop.f32.mrb[0].mxu0
    %v803 = vadd.f32 0.0, %v802
    %v804 = vpop.f32.mrb[0].mxu0
    %v805 = vpop.f32.mrb[0].mxu0
    %v806 = vadd.f32 0.0, %v805
    %v807 = vpop.f32.mrb[0].mxu0
    %808 = vmatprep.mubr.bf16.mxu0 %v487
    %809 = vmatmul.mubr.bf16.gmra.mrb[0].mxu0 %v486
    %v810 = vpop.f32.mrb[0].mxu0
    %v811 = vadd.f32 0.0, %v810
    %v812 = vpop.f32.mrb[0].mxu0
    %v813 = vpop.f32.mrb[0].mxu0
    %v814 = vadd.f32 0.0, %v813
    %v815 = vpop.f32.mrb[0].mxu0
    %816 = vmatprep.mubr.bf16.mxu0 %v489
    %817 = vmatmul.mubr.bf16.gmra.mrb[0].mxu0 %v488
    %v818 = vpop.f32.mrb[0].mxu0
    %v819 = vadd.f32 0.0, %v818
    %v820 = vpop.f32.mrb[0].mxu0
    %v821 = vpop.f32.mrb[0].mxu0
    %v822 = vadd.f32 0.0, %v821
    %v823 = vpop.f32.mrb[0].mxu0
    %824 = vmatprep.mubr.bf16.mxu0 %v491
    %825 = vmatmul.mubr.bf16.gmra.mrb[0].mxu0 %v490
    %v826 = vpop.f32.mrb[0].mxu0
    %v827 = vadd.f32 0.0, %v826
    %v828 = vpop.f32.mrb[0].mxu0
    %v829 = vpop.f32.mrb[0].mxu0
    %v830 = vadd.f32 0.0, %v829
    %v831 = vpop.f32.mrb[0].mxu0
    %832 = vmatprep.mubr.bf16.mxu0 %v493
    %833 = vmatmul.mubr.bf16.gmra.mrb[0].mxu0 %v492
    %v834 = vpop.f32.mrb[0].mxu0
    %v835 = vadd.f32 0.0, %v834
    %v836 = vpop.f32.mrb[0].mxu0
    %v837 = vpop.f32.mrb[0].mxu0
    %v838 = vadd.f32 0.0, %v837
    %v839 = vpop.f32.mrb[0].mxu0
    %840 = vmatprep.mubr.bf16.mxu0 %v495
    %841 = vmatmul.mubr.bf16.gmra.mrb[0].mxu0 %v494
    %v842 = vpop.f32.mrb[0].mxu0
    %v843 = vadd.f32 0.0, %v842
    %v844 = vpop.f32.mrb[0].mxu0
    %v845 = vpop.f32.mrb[0].mxu0
    %v846 = vadd.f32 0.0, %v845
    %v847 = vpop.f32.mrb[0].mxu0
    %848 = vmatprep.mubr.bf16.mxu0 %v497
    %849 = vmatmul.mubr.bf16.gmra.mrb[0].mxu0 %v496
    %v850 = vpop.f32.mrb[0].mxu0
    %v851 = vadd.f32 0.0, %v850
    %v852 = vpop.f32.mrb[0].mxu0
    %v853 = vpop.f32.mrb[0].mxu0
    %v854 = vadd.f32 0.0, %v853
    %v855 = vpop.f32.mrb[0].mxu0
    %856 = vmatprep.mubr.bf16.mxu0 %v499
    %857 = vmatmul.mubr.bf16.gmra.mrb[0].mxu0 %v498
    %v858 = vpop.f32.mrb[0].mxu0
    %v859 = vadd.f32 0.0, %v858
    %v860 = vpop.f32.mrb[0].mxu0
    %v861 = vpop.f32.mrb[0].mxu0
    %v862 = vadd.f32 0.0, %v861
    %v863 = vpop.f32.mrb[0].mxu0
    %864 = vmatprep.mubr.bf16.mxu0 %v501
    %865 = vmatmul.mubr.bf16.gmra.mrb[0].mxu0 %v500
    %v866 = vpop.f32.mrb[0].mxu0
    %v867 = vadd.f32 0.0, %v866
    %v868 = vpop.f32.mrb[0].mxu0
    %v869 = vpop.f32.mrb[0].mxu0
    %v870 = vadd.f32 0.0, %v869
    %v871 = vpop.f32.mrb[0].mxu0
    %872 = vmatprep.mubr.bf16.mxu0 %v503
    %873 = vmatmul.mubr.bf16.gmra.mrb[0].mxu0 %v502
    %v874 = vpop.f32.mrb[0].mxu0
    %v875 = vadd.f32 0.0, %v874
    %v876 = vpop.f32.mrb[0].mxu0
    %v877 = vpop.f32.mrb[0].mxu0
    %v878 = vadd.f32 0.0, %v877
    %v879 = vpop.f32.mrb[0].mxu0
    %880 = vmatprep.mubr.bf16.mxu0 %v505
    %881 = vmatmul.mubr.bf16.gmra.mrb[0].mxu0 %v504
    %v882 = vpop.f32.mrb[0].mxu0
    %v883 = vadd.f32 0.0, %v882
    %v884 = vpop.f32.mrb[0].mxu0
    %v885 = vpop.f32.mrb[0].mxu0
    %v886 = vadd.f32 0.0, %v885
    %v887 = vpop.f32.mrb[0].mxu0
    %888 = vmatprep.mubr.bf16.mxu0 %v507
    %889 = vmatmul.mubr.bf16.gmra.mrb[0].mxu0 %v506
    %v890 = vpop.f32.mrb[0].mxu0
    %v891 = vadd.f32 0.0, %v890
    %v892 = vpop.f32.mrb[0].mxu0
    %v893 = vpop.f32.mrb[0].mxu0
    %v894 = vadd.f32 0.0, %v893
    %v895 = vpop.f32.mrb[0].mxu0
    %896 = vmatprep.mubr.bf16.mxu0 %v509
    %897 = vmatmul.mubr.bf16.gmra.mrb[0].mxu0 %v508
    %v898 = vpop.f32.mrb[0].mxu0
    %v899 = vadd.f32 0.0, %v898
    %v900 = vpop.f32.mrb[0].mxu0
    %v901 = vpop.f32.mrb[0].mxu0
    %v902 = vadd.f32 0.0, %v901
    %v903 = vpop.f32.mrb[0].mxu0
    %904 = vmatprep.mubr.bf16.mxu0 %v511
    %905 = vmatmul.mubr.bf16.gmra.mrb[0].mxu0 %v510
    %v906 = vpop.f32.mrb[0].mxu0
    %v907 = vadd.f32 0.0, %v906
    %v908 = vpop.f32.mrb[0].mxu0
    %v909 = vpop.f32.mrb[0].mxu0
    %v910 = vadd.f32 0.0, %v909
    %v911 = vpop.f32.mrb[0].mxu0
    %912 = vmatprep.mubr.bf16.mxu0 %v513
    %913 = vmatmul.mubr.bf16.gmra.mrb[0].mxu0 %v512
    %v914 = vpop.f32.mrb[0].mxu0
    %v915 = vadd.f32 0.0, %v914
    %v916 = vpop.f32.mrb[0].mxu0
    %v917 = vpop.f32.mrb[0].mxu0
    %v918 = vadd.f32 0.0, %v917
    %v919 = vpop.f32.mrb[0].mxu0
    %920 = vmatprep.mubr.bf16.mxu0 %v515
    %921 = vmatmul.mubr.bf16.gmra.mrb[0].mxu0 %v514
    %v922 = vpop.f32.mrb[0].mxu0
    %v923 = vadd.f32 0.0, %v922
    %v924 = vpop.f32.mrb[0].mxu0
    %v925 = vpop.f32.mrb[0].mxu0
    %v926 = vadd.f32 0.0, %v925
    %v927 = vpop.f32.mrb[0].mxu0
    %928 = vmatprep.mubr.bf16.mxu0 %v517
    %929 = vmatmul.mubr.bf16.gmra.mrb[0].mxu0 %v516
    %v930 = vpop.f32.mrb[0].mxu0
    %v931 = vadd.f32 0.0, %v930
    %v932 = vpop.f32.mrb[0].mxu0
    %v933 = vpop.f32.mrb[0].mxu0
    %v934 = vadd.f32 0.0, %v933
    %v935 = vpop.f32.mrb[0].mxu0
    %936 = vmatprep.mubr.bf16.mxu0 %v519
    %937 = vmatmul.mubr.bf16.gmra.mrb[0].mxu0 %v518
    %v938 = vpop.f32.mrb[0].mxu0
    %v939 = vadd.f32 0.0, %v938
    %v940 = vpop.f32.mrb[0].mxu0
    %v941 = vpop.f32.mrb[0].mxu0
    %v942 = vadd.f32 0.0, %v941
    %v943 = vpop.f32.mrb[0].mxu0
    %944 = vmatprep.mubr.bf16.mxu0 %v521
    %945 = vmatmul.mubr.bf16.gmra.mrb[0].mxu0 %v520
    %v946 = vpop.f32.mrb[0].mxu0
    %v947 = vadd.f32 0.0, %v946
    %v948 = vpop.f32.mrb[0].mxu0
    %v949 = vpop.f32.mrb[0].mxu0
    %v950 = vadd.f32 0.0, %v949
    %v951 = vpop.f32.mrb[0].mxu0
    %952 = vmatprep.mubr.bf16.mxu0 %v523
    %953 = vmatmul.mubr.bf16.gmra.mrb[0].mxu0 %v522
    %v954 = vpop.f32.mrb[0].mxu0
    %v955 = vadd.f32 0.0, %v954
    %v956 = vpop.f32.mrb[0].mxu0
    %v957 = vpop.f32.mrb[0].mxu0
    %v958 = vadd.f32 0.0, %v957
    %v959 = vpop.f32.mrb[0].mxu0
    %960 = vmatprep.mubr.bf16.mxu0 %v525
    %961 = vmatmul.mubr.bf16.gmra.mrb[0].mxu0 %v524
    %v962 = vpop.f32.mrb[0].mxu0
    %v963 = vadd.f32 0.0, %v962
    %v964 = vpop.f32.mrb[0].mxu0
    %v965 = vpop.f32.mrb[0].mxu0
    %v966 = vadd.f32 0.0, %v965
    %v967 = vpop.f32.mrb[0].mxu0
    %968 = vmatprep.mubr.bf16.mxu0 %v527
    %969 = vmatmul.mubr.bf16.gmra.mrb[0].mxu0 %v526
    %v970 = vpop.f32.mrb[0].mxu0
    %v971 = vadd.f32 0.0, %v970
    %v972 = vpop.f32.mrb[0].mxu0
    %v973 = vpop.f32.mrb[0].mxu0
    %v974 = vadd.f32 0.0, %v973
    %v975 = vpop.f32.mrb[0].mxu0
    %976 = vdwg.mxu0
    %v977 = vadd.f32 %v112, %v723
    %v978 = vadd.f32 %v113, %v726
    %v979 = vadd.f32 %v114, %v731
    %v980 = vadd.f32 %v115, %v734
    %v981 = vadd.f32 %v116, %v739
    %v982 = vadd.f32 %v117, %v742
    %v983 = vadd.f32 %v118, %v747
    %v984 = vadd.f32 %v119, %v750
    %v985 = vadd.f32 %v120, %v755
    %v986 = vadd.f32 %v121, %v758
    %v987 = vadd.f32 %v122, %v763
    %v988 = vadd.f32 %v123, %v766
    %v989 = vadd.f32 %v124, %v771
    %v990 = vadd.f32 %v125, %v774
    %v991 = vadd.f32 %v126, %v779
    %v992 = vadd.f32 %v127, %v782
    %v993 = vadd.f32 %v128, %v787
    %v994 = vadd.f32 %v129, %v790
    %v995 = vadd.f32 %v130, %v795
    %v996 = vadd.f32 %v131, %v798
    %v997 = vadd.f32 %v132, %v803
    %v998 = vadd.f32 %v133, %v806
    %v999 = vadd.f32 %v134, %v811
    %v1000 = vadd.f32 %v135, %v814
    %v1001 = vadd.f32 %v136, %v819
    %v1002 = vadd.f32 %v137, %v822
    %v1003 = vadd.f32 %v138, %v827
    %v1004 = vadd.f32 %v139, %v830
    %v1005 = vadd.f32 %v140, %v835
    %v1006 = vadd.f32 %v141, %v838
    %v1007 = vadd.f32 %v142, %v843
    %v1008 = vadd.f32 %v143, %v846
    %v1009 = vadd.f32 %v144, %v851
    %v1010 = vadd.f32 %v145, %v854
    %v1011 = vadd.f32 %v146, %v859
    %v1012 = vadd.f32 %v147, %v862
    %v1013 = vadd.f32 %v148, %v867
    %v1014 = vadd.f32 %v149, %v870
    %v1015 = vadd.f32 %v150, %v875
    %v1016 = vadd.f32 %v151, %v878
    %v1017 = vadd.f32 %v152, %v883
    %v1018 = vadd.f32 %v153, %v886
    %v1019 = vadd.f32 %v154, %v891
    %v1020 = vadd.f32 %v155, %v894
    %v1021 = vadd.f32 %v156, %v899
    %v1022 = vadd.f32 %v157, %v902
    %v1023 = vadd.f32 %v158, %v907
    %v1024 = vadd.f32 %v159, %v910
    %v1025 = vadd.f32 %v160, %v915
    %v1026 = vadd.f32 %v161, %v918
    %v1027 = vadd.f32 %v162, %v923
    %v1028 = vadd.f32 %v163, %v926
    %v1029 = vadd.f32 %v164, %v931
    %v1030 = vadd.f32 %v165, %v934
    %v1031 = vadd.f32 %v166, %v939
    %v1032 = vadd.f32 %v167, %v942
    %v1033 = vadd.f32 %v168, %v947
    %v1034 = vadd.f32 %v169, %v950
    %v1035 = vadd.f32 %v170, %v955
    %v1036 = vadd.f32 %v171, %v958
    %v1037 = vadd.f32 %v172, %v963
    %v1038 = vadd.f32 %v173, %v966
    %v1039 = vadd.f32 %v174, %v971
    %v1040 = vadd.f32 %v175, %v974
    %1041 = vst [vmem:[#allocation2] sm:$0xff] %v977
    %1042 = vst [vmem:[#allocation2 + $0x8] sm:$0xff] %v978
    %1043 = vst [vmem:[#allocation2 + $0x10] sm:$0xff] %v979
    %1044 = vst [vmem:[#allocation2 + $0x18] sm:$0xff] %v980
    %1045 = vst [vmem:[#allocation2 + $0x20] sm:$0xff] %v981
    %1046 = vst [vmem:[#allocation2 + $0x28] sm:$0xff] %v982
    %1047 = vst [vmem:[#allocation2 + $0x30] sm:$0xff] %v983
    %1048 = vst [vmem:[#allocation2 + $0x38] sm:$0xff] %v984
    %1049 = vst [vmem:[#allocation2 + $0x40] sm:$0xff] %v985
    %1050 = vst [vmem:[#allocation2 + $0x48] sm:$0xff] %v986
    %1051 = vst [vmem:[#allocation2 + $0x50] sm:$0xff] %v987
    %1052 = vst [vmem:[#allocation2 + $0x58] sm:$0xff] %v988
    %1053 = vst [vmem:[#allocation2 + $0x60] sm:$0xff] %v989
    %1054 = vst [vmem:[#allocation2 + $0x68] sm:$0xff] %v990
    %1055 = vst [vmem:[#allocation2 + $0x70] sm:$0xff] %v991
    %1056 = vst [vmem:[#allocation2 + $0x78] sm:$0xff] %v992
    %1057 = vst [vmem:[#allocation2 + $0x80] sm:$0xff] %v993
    %1058 = vst [vmem:[#allocation2 + $0x88] sm:$0xff] %v994
    %1059 = vst [vmem:[#allocation2 + $0x90] sm:$0xff] %v995
    %1060 = vst [vmem:[#allocation2 + $0x98] sm:$0xff] %v996
    %1061 = vst [vmem:[#allocation2 + $0xa0] sm:$0xff] %v997
    %1062 = vst [vmem:[#allocation2 + $0xa8] sm:$0xff] %v998
    %1063 = vst [vmem:[#allocation2 + $0xb0] sm:$0xff] %v999
    %1064 = vst [vmem:[#allocation2 + $0xb8] sm:$0xff] %v1000
    %1065 = vst [vmem:[#allocation2 + $0xc0] sm:$0xff] %v1001
    %1066 = vst [vmem:[#allocation2 + $0xc8] sm:$0xff] %v1002
    %1067 = vst [vmem:[#allocation2 + $0xd0] sm:$0xff] %v1003
    %1068 = vst [vmem:[#allocation2 + $0xd8] sm:$0xff] %v1004
    %1069 = vst [vmem:[#allocation2 + $0xe0] sm:$0xff] %v1005
    %1070 = vst [vmem:[#allocation2 + $0xe8] sm:$0xff] %v1006
    %1071 = vst [vmem:[#allocation2 + $0xf0] sm:$0xff] %v1007
    %1072 = vst [vmem:[#allocation2 + $0xf8] sm:$0xff] %v1008
    %1073 = vst [vmem:[#allocation2 + $0x100] sm:$0xff] %v1009
    %1074 = vst [vmem:[#allocation2 + $0x108] sm:$0xff] %v1010
    %1075 = vst [vmem:[#allocation2 + $0x110] sm:$0xff] %v1011
    %1076 = vst [vmem:[#allocation2 + $0x118] sm:$0xff] %v1012
    %1077 = vst [vmem:[#allocation2 + $0x120] sm:$0xff] %v1013
    %1078 = vst [vmem:[#allocation2 + $0x128] sm:$0xff] %v1014
    %1079 = vst [vmem:[#allocation2 + $0x130] sm:$0xff] %v1015
    %1080 = vst [vmem:[#allocation2 + $0x138] sm:$0xff] %v1016
    %1081 = vst [vmem:[#allocation2 + $0x140] sm:$0xff] %v1017
    %1082 = vst [vmem:[#allocation2 + $0x148] sm:$0xff] %v1018
    %1083 = vst [vmem:[#allocation2 + $0x150] sm:$0xff] %v1019
    %1084 = vst [vmem:[#allocation2 + $0x158] sm:$0xff] %v1020
    %1085 = vst [vmem:[#allocation2 + $0x160] sm:$0xff] %v1021
    %1086 = vst [vmem:[#allocation2 + $0x168] sm:$0xff] %v1022
    %1087 = vst [vmem:[#allocation2 + $0x170] sm:$0xff] %v1023
    %1088 = vst [vmem:[#allocation2 + $0x178] sm:$0xff] %v1024
    %1089 = vst [vmem:[#allocation2 + $0x180] sm:$0xff] %v1025
    %1090 = vst [vmem:[#allocation2 + $0x188] sm:$0xff] %v1026
    %1091 = vst [vmem:[#allocation2 + $0x190] sm:$0xff] %v1027
    %1092 = vst [vmem:[#allocation2 + $0x198] sm:$0xff] %v1028
    %1093 = vst [vmem:[#allocation2 + $0x1a0] sm:$0xff] %v1029
    %1094 = vst [vmem:[#allocation2 + $0x1a8] sm:$0xff] %v1030
    %1095 = vst [vmem:[#allocation2 + $0x1b0] sm:$0xff] %v1031
    %1096 = vst [vmem:[#allocation2 + $0x1b8] sm:$0xff] %v1032
    %1097 = vst [vmem:[#allocation2 + $0x1c0] sm:$0xff] %v1033
    %1098 = vst [vmem:[#allocation2 + $0x1c8] sm:$0xff] %v1034
    %1099 = vst [vmem:[#allocation2 + $0x1d0] sm:$0xff] %v1035
    %1100 = vst [vmem:[#allocation2 + $0x1d8] sm:$0xff] %v1036
    %1101 = vst [vmem:[#allocation2 + $0x1e0] sm:$0xff] %v1037
    %1102 = vst [vmem:[#allocation2 + $0x1e8] sm:$0xff] %v1038
    %1103 = vst [vmem:[#allocation2 + $0x1f0] sm:$0xff] %v1039
    %1104 = vst [vmem:[#allocation2 + $0x1f8] sm:$0xff] %v1040
    // Predicated region
    $region26: #{tpu_custom_call.1} parent=1 // pred_check
      %p1105 = pneg %p44
    $region27: #{tpu_custom_call.1} parent=1 // pred_check_branch
      %1107 = sbr.rel (%p1105) target = $region29
    $region28: #{tpu_custom_call.1} parent=1 // pred_region
      %v1108 = vld [vmem:[#allocation2] sm:$0xff]
      %v1109 = vld [vmem:[#allocation2 + $0x8] sm:$0xff]
      %v1110 = vld [vmem:[#allocation2 + $0x10] sm:$0xff]
      %v1111 = vld [vmem:[#allocation2 + $0x18] sm:$0xff]
      %v1112 = vld [vmem:[#allocation2 + $0x20] sm:$0xff]
      %v1113 = vld [vmem:[#allocation2 + $0x28] sm:$0xff]
      %v1114 = vld [vmem:[#allocation2 + $0x30] sm:$0xff]
      %v1115 = vld [vmem:[#allocation2 + $0x38] sm:$0xff]
      %v1116 = vld [vmem:[#allocation2 + $0x40] sm:$0xff]
      %v1117 = vld [vmem:[#allocation2 + $0x48] sm:$0xff]
      %v1118 = vld [vmem:[#allocation2 + $0x50] sm:$0xff]
      %v1119 = vld [vmem:[#allocation2 + $0x58] sm:$0xff]
      %v1120 = vld [vmem:[#allocation2 + $0x60] sm:$0xff]
      %v1121 = vld [vmem:[#allocation2 + $0x68] sm:$0xff]
      %v1122 = vld [vmem:[#allocation2 + $0x70] sm:$0xff]
      %v1123 = vld [vmem:[#allocation2 + $0x78] sm:$0xff]
      %v1124 = vld [vmem:[#allocation2 + $0x80] sm:$0xff]
      %v1125 = vld [vmem:[#allocation2 + $0x88] sm:$0xff]
      %v1126 = vld [vmem:[#allocation2 + $0x90] sm:$0xff]
      %v1127 = vld [vmem:[#allocation2 + $0x98] sm:$0xff]
      %v1128 = vld [vmem:[#allocation2 + $0xa0] sm:$0xff]
      %v1129 = vld [vmem:[#allocation2 + $0xa8] sm:$0xff]
      %v1130 = vld [vmem:[#allocation2 + $0xb0] sm:$0xff]
      %v1131 = vld [vmem:[#allocation2 + $0xb8] sm:$0xff]
      %v1132 = vld [vmem:[#allocation2 + $0xc0] sm:$0xff]
      %v1133 = vld [vmem:[#allocation2 + $0xc8] sm:$0xff]
      %v1134 = vld [vmem:[#allocation2 + $0xd0] sm:$0xff]
      %v1135 = vld [vmem:[#allocation2 + $0xd8] sm:$0xff]
      %v1136 = vld [vmem:[#allocation2 + $0xe0] sm:$0xff]
      %v1137 = vld [vmem:[#allocation2 + $0xe8] sm:$0xff]
      %v1138 = vld [vmem:[#allocation2 + $0xf0] sm:$0xff]
      %v1139 = vld [vmem:[#allocation2 + $0xf8] sm:$0xff]
      %v1140 = vld [vmem:[#allocation2 + $0x100] sm:$0xff]
      %v1141 = vld [vmem:[#allocation2 + $0x108] sm:$0xff]
      %v1142 = vld [vmem:[#allocation2 + $0x110] sm:$0xff]
      %v1143 = vld [vmem:[#allocation2 + $0x118] sm:$0xff]
      %v1144 = vld [vmem:[#allocation2 + $0x120] sm:$0xff]
      %v1145 = vld [vmem:[#allocation2 + $0x128] sm:$0xff]
      %v1146 = vld [vmem:[#allocation2 + $0x130] sm:$0xff]
      %v1147 = vld [vmem:[#allocation2 + $0x138] sm:$0xff]
      %v1148 = vld [vmem:[#allocation2 + $0x140] sm:$0xff]
      %v1149 = vld [vmem:[#allocation2 + $0x148] sm:$0xff]
      %v1150 = vld [vmem:[#allocation2 + $0x150] sm:$0xff]
      %v1151 = vld [vmem:[#allocation2 + $0x158] sm:$0xff]
      %v1152 = vld [vmem:[#allocation2 + $0x160] sm:$0xff]
      %v1153 = vld [vmem:[#allocation2 + $0x168] sm:$0xff]
      %v1154 = vld [vmem:[#allocation2 + $0x170] sm:$0xff]
      %v1155 = vld [vmem:[#allocation2 + $0x178] sm:$0xff]
      %v1156 = vld [vmem:[#allocation2 + $0x180] sm:$0xff]
      %v1157 = vld [vmem:[#allocation2 + $0x188] sm:$0xff]
      %v1158 = vld [vmem:[#allocation2 + $0x190] sm:$0xff]
      %v1159 = vld [vmem:[#allocation2 + $0x198] sm:$0xff]
      %v1160 = vld [vmem:[#allocation2 + $0x1a0] sm:$0xff]
      %v1161 = vld [vmem:[#allocation2 + $0x1a8] sm:$0xff]
      %v1162 = vld [vmem:[#allocation2 + $0x1b0] sm:$0xff]
      %v1163 = vld [vmem:[#allocation2 + $0x1b8] sm:$0xff]
      %v1164 = vld [vmem:[#allocation2 + $0x1c0] sm:$0xff]
      %v1165 = vld [vmem:[#allocation2 + $0x1c8] sm:$0xff]
      %v1166 = vld [vmem:[#allocation2 + $0x1d0] sm:$0xff]
      %v1167 = vld [vmem:[#allocation2 + $0x1d8] sm:$0xff]
      %v1168 = vld [vmem:[#allocation2 + $0x1e0] sm:$0xff]
      %v1169 = vld [vmem:[#allocation2 + $0x1e8] sm:$0xff]
      %v1170 = vld [vmem:[#allocation2 + $0x1f0] sm:$0xff]
      %v1171 = vld [vmem:[#allocation2 + $0x1f8] sm:$0xff]
      %v1172 = vld [vmem:[%s2] sm:$0x1]
      %v1174 = vlaneseq
      %v1175 = vshrl.u32 %v1174, 7
      %v1176 = vsub.s32 0, %v1175
      %v1177 = vrot.slane %v1172, %v1176
      %v1179 = vadd.f32 %v1108, %v1177
      %v1180 = vadd.f32 %v1109, %v1177
      %v1181 = vadd.f32 %v1110, %v1177
      %v1182 = vadd.f32 %v1111, %v1177
      %v1183 = vadd.f32 %v1112, %v1177
      %v1184 = vadd.f32 %v1113, %v1177
      %v1185 = vadd.f32 %v1114, %v1177
      %v1186 = vadd.f32 %v1115, %v1177
      %v1187 = vadd.f32 %v1116, %v1177
      %v1188 = vadd.f32 %v1117, %v1177
      %v1189 = vadd.f32 %v1118, %v1177
      %v1190 = vadd.f32 %v1119, %v1177
      %v1191 = vadd.f32 %v1120, %v1177
      %v1192 = vadd.f32 %v1121, %v1177
      %v1193 = vadd.f32 %v1122, %v1177
      %v1194 = vadd.f32 %v1123, %v1177
      %v1195 = vadd.f32 %v1124, %v1177
      %v1196 = vadd.f32 %v1125, %v1177
      %v1197 = vadd.f32 %v1126, %v1177
      %v1198 = vadd.f32 %v1127, %v1177
      %v1199 = vadd.f32 %v1128, %v1177
      %v1200 = vadd.f32 %v1129, %v1177
      %v1201 = vadd.f32 %v1130, %v1177
      %v1202 = vadd.f32 %v1131, %v1177
      %v1203 = vadd.f32 %v1132, %v1177
      %v1204 = vadd.f32 %v1133, %v1177
      %v1205 = vadd.f32 %v1134, %v1177
      %v1206 = vadd.f32 %v1135, %v1177
      %v1207 = vadd.f32 %v1136, %v1177
      %v1208 = vadd.f32 %v1137, %v1177
      %v1209 = vadd.f32 %v1138, %v1177
      %v1210 = vadd.f32 %v1139, %v1177
      %v1211 = vadd.f32 %v1140, %v1177
      %v1212 = vadd.f32 %v1141, %v1177
      %v1213 = vadd.f32 %v1142, %v1177
      %v1214 = vadd.f32 %v1143, %v1177
      %v1215 = vadd.f32 %v1144, %v1177
      %v1216 = vadd.f32 %v1145, %v1177
      %v1217 = vadd.f32 %v1146, %v1177
      %v1218 = vadd.f32 %v1147, %v1177
      %v1219 = vadd.f32 %v1148, %v1177
      %v1220 = vadd.f32 %v1149, %v1177
      %v1221 = vadd.f32 %v1150, %v1177
      %v1222 = vadd.f32 %v1151, %v1177
      %v1223 = vadd.f32 %v1152, %v1177
      %v1224 = vadd.f32 %v1153, %v1177
      %v1225 = vadd.f32 %v1154, %v1177
      %v1226 = vadd.f32 %v1155, %v1177
      %v1227 = vadd.f32 %v1156, %v1177
      %v1228 = vadd.f32 %v1157, %v1177
      %v1229 = vadd.f32 %v1158, %v1177
      %v1230 = vadd.f32 %v1159, %v1177
      %v1231 = vadd.f32 %v1160, %v1177
      %v1232 = vadd.f32 %v1161, %v1177
      %v1233 = vadd.f32 %v1162, %v1177
      %v1234 = vadd.f32 %v1163, %v1177
      %v1235 = vadd.f32 %v1164, %v1177
      %v1236 = vadd.f32 %v1165, %v1177
      %v1237 = vadd.f32 %v1166, %v1177
      %v1238 = vadd.f32 %v1167, %v1177
      %v1239 = vadd.f32 %v1168, %v1177
      %v1240 = vadd.f32 %v1169, %v1177
      %v1241 = vadd.f32 %v1170, %v1177
      %v1242 = vadd.f32 %v1171, %v1177
      %v1243 = vmax.f32 %v1179, 0.0
      %v1244 = vmax.f32 %v1180, 0.0
      %v1245 = vmax.f32 %v1181, 0.0
      %v1246 = vmax.f32 %v1182, 0.0
      %v1247 = vmax.f32 %v1183, 0.0
      %v1248 = vmax.f32 %v1184, 0.0
      %v1249 = vmax.f32 %v1185, 0.0
      %v1250 = vmax.f32 %v1186, 0.0
      %v1251 = vmax.f32 %v1187, 0.0
      %v1252 = vmax.f32 %v1188, 0.0
      %v1253 = vmax.f32 %v1189, 0.0
      %v1254 = vmax.f32 %v1190, 0.0
      %v1255 = vmax.f32 %v1191, 0.0
      %v1256 = vmax.f32 %v1192, 0.0
      %v1257 = vmax.f32 %v1193, 0.0
      %v1258 = vmax.f32 %v1194, 0.0
      %v1259 = vmax.f32 %v1195, 0.0
      %v1260 = vmax.f32 %v1196, 0.0
      %v1261 = vmax.f32 %v1197, 0.0
      %v1262 = vmax.f32 %v1198, 0.0
      %v1263 = vmax.f32 %v1199, 0.0
      %v1264 = vmax.f32 %v1200, 0.0
      %v1265 = vmax.f32 %v1201, 0.0
      %v1266 = vmax.f32 %v1202, 0.0
      %v1267 = vmax.f32 %v1203, 0.0
      %v1268 = vmax.f32 %v1204, 0.0
      %v1269 = vmax.f32 %v1205, 0.0
      %v1270 = vmax.f32 %v1206, 0.0
      %v1271 = vmax.f32 %v1207, 0.0
      %v1272 = vmax.f32 %v1208, 0.0
      %v1273 = vmax.f32 %v1209, 0.0
      %v1274 = vmax.f32 %v1210, 0.0
      %v1275 = vmax.f32 %v1211, 0.0
      %v1276 = vmax.f32 %v1212, 0.0
      %v1277 = vmax.f32 %v1213, 0.0
      %v1278 = vmax.f32 %v1214, 0.0
      %v1279 = vmax.f32 %v1215, 0.0
      %v1280 = vmax.f32 %v1216, 0.0
      %v1281 = vmax.f32 %v1217, 0.0
      %v1282 = vmax.f32 %v1218, 0.0
      %v1283 = vmax.f32 %v1219, 0.0
      %v1284 = vmax.f32 %v1220, 0.0
      %v1285 = vmax.f32 %v1221, 0.0
      %v1286 = vmax.f32 %v1222, 0.0
      %v1287 = vmax.f32 %v1223, 0.0
      %v1288 = vmax.f32 %v1224, 0.0
      %v1289 = vmax.f32 %v1225, 0.0
      %v1290 = vmax.f32 %v1226, 0.0
      %v1291 = vmax.f32 %v1227, 0.0
      %v1292 = vmax.f32 %v1228, 0.0
      %v1293 = vmax.f32 %v1229, 0.0
      %v1294 = vmax.f32 %v1230, 0.0
      %v1295 = vmax.f32 %v1231, 0.0
      %v1296 = vmax.f32 %v1232, 0.0
      %v1297 = vmax.f32 %v1233, 0.0
      %v1298 = vmax.f32 %v1234, 0.0
      %v1299 = vmax.f32 %v1235, 0.0
      %v1300 = vmax.f32 %v1236, 0.0
      %v1301 = vmax.f32 %v1237, 0.0
      %v1302 = vmax.f32 %v1238, 0.0
      %v1303 = vmax.f32 %v1239, 0.0
      %v1304 = vmax.f32 %v1240, 0.0
      %v1305 = vmax.f32 %v1241, 0.0
      %v1306 = vmax.f32 %v1242, 0.0
      %v1307 = vpack.c.bf16 %v1244, %v1243
      %v1308 = vpack.c.bf16 %v1246, %v1245
      %v1309 = vpack.c.bf16 %v1248, %v1247
      %v1310 = vpack.c.bf16 %v1250, %v1249
      %v1311 = vpack.c.bf16 %v1252, %v1251
      %v1312 = vpack.c.bf16 %v1254, %v1253
      %v1313 = vpack.c.bf16 %v1256, %v1255
      %v1314 = vpack.c.bf16 %v1258, %v1257
      %v1315 = vpack.c.bf16 %v1260, %v1259
      %v1316 = vpack.c.bf16 %v1262, %v1261
      %v1317 = vpack.c.bf16 %v1264, %v1263
      %v1318 = vpack.c.bf16 %v1266, %v1265
      %v1319 = vpack.c.bf16 %v1268, %v1267
      %v1320 = vpack.c.bf16 %v1270, %v1269
      %v1321 = vpack.c.bf16 %v1272, %v1271
      %v1322 = vpack.c.bf16 %v1274, %v1273
      %v1323 = vpack.c.bf16 %v1276, %v1275
      %v1324 = vpack.c.bf16 %v1278, %v1277
      %v1325 = vpack.c.bf16 %v1280, %v1279
      %v1326 = vpack.c.bf16 %v1282, %v1281
      %v1327 = vpack.c.bf16 %v1284, %v1283
      %v1328 = vpack.c.bf16 %v1286, %v1285
      %v1329 = vpack.c.bf16 %v1288, %v1287
      %v1330 = vpack.c.bf16 %v1290, %v1289
      %v1331 = vpack.c.bf16 %v1292, %v1291
      %v1332 = vpack.c.bf16 %v1294, %v1293
      %v1333 = vpack.c.bf16 %v1296, %v1295
      %v1334 = vpack.c.bf16 %v1298, %v1297
      %v1335 = vpack.c.bf16 %v1300, %v1299
      %v1336 = vpack.c.bf16 %v1302, %v1301
      %v1337 = vpack.c.bf16 %v1304, %v1303
      %v1338 = vpack.c.bf16 %v1306, %v1305
      %v1371 = vunpack.c.l.b16 %v1307
      %v1372 = vunpack.c.h.b16 %v1307
      %v1373 = vunpack.c.l.b16 %v1308
      %v1374 = vunpack.c.h.b16 %v1308
      %v1375 = vunpack.c.l.b16 %v1309
      %v1376 = vunpack.c.h.b16 %v1309
      %v1377 = vunpack.c.l.b16 %v1310
      %v1378 = vunpack.c.h.b16 %v1310
      %v1379 = vunpack.c.l.b16 %v1311
      %v1380 = vunpack.c.h.b16 %v1311
      %v1381 = vunpack.c.l.b16 %v1312
      %v1382 = vunpack.c.h.b16 %v1312
      %v1383 = vunpack.c.l.b16 %v1313
      %v1384 = vunpack.c.h.b16 %v1313
      %v1385 = vunpack.c.l.b16 %v1314
      %v1386 = vunpack.c.h.b16 %v1314
      %v1387 = vunpack.c.l.b16 %v1315
      %v1388 = vunpack.c.h.b16 %v1315
      %v1389 = vunpack.c.l.b16 %v1316
      %v1390 = vunpack.c.h.b16 %v1316
      %v1391 = vunpack.c.l.b16 %v1317
      %v1392 = vunpack.c.h.b16 %v1317
      %v1393 = vunpack.c.l.b16 %v1318
      %v1394 = vunpack.c.h.b16 %v1318
      %v1395 = vunpack.c.l.b16 %v1319
      %v1396 = vunpack.c.h.b16 %v1319
      %v1397 = vunpack.c.l.b16 %v1320
      %v1398 = vunpack.c.h.b16 %v1320
      %v1399 = vunpack.c.l.b16 %v1321
      %v1400 = vunpack.c.h.b16 %v1321
      %v1401 = vunpack.c.l.b16 %v1322
      %v1402 = vunpack.c.h.b16 %v1322
      %v1403 = vunpack.c.l.b16 %v1323
      %v1404 = vunpack.c.h.b16 %v1323
      %v1405 = vunpack.c.l.b16 %v1324
      %v1406 = vunpack.c.h.b16 %v1324
      %v1407 = vunpack.c.l.b16 %v1325
      %v1408 = vunpack.c.h.b16 %v1325
      %v1409 = vunpack.c.l.b16 %v1326
      %v1410 = vunpack.c.h.b16 %v1326
      %v1411 = vunpack.c.l.b16 %v1327
      %v1412 = vunpack.c.h.b16 %v1327
      %v1413 = vunpack.c.l.b16 %v1328
      %v1414 = vunpack.c.h.b16 %v1328
      %v1415 = vunpack.c.l.b16 %v1329
      %v1416 = vunpack.c.h.b16 %v1329
      %v1417 = vunpack.c.l.b16 %v1330
      %v1418 = vunpack.c.h.b16 %v1330
      %v1419 = vunpack.c.l.b16 %v1331
      %v1420 = vunpack.c.h.b16 %v1331
      %v1421 = vunpack.c.l.b16 %v1332
      %v1422 = vunpack.c.h.b16 %v1332
      %v1423 = vunpack.c.l.b16 %v1333
      %v1424 = vunpack.c.h.b16 %v1333
      %v1425 = vunpack.c.l.b16 %v1334
      %v1426 = vunpack.c.h.b16 %v1334
      %v1427 = vunpack.c.l.b16 %v1335
      %v1428 = vunpack.c.h.b16 %v1335
      %v1429 = vunpack.c.l.b16 %v1336
      %v1430 = vunpack.c.h.b16 %v1336
      %v1431 = vunpack.c.l.b16 %v1337
      %v1432 = vunpack.c.h.b16 %v1337
      %v1433 = vunpack.c.l.b16 %v1338
      %v1434 = vunpack.c.h.b16 %v1338
      %v1435 = vpack.c.b16 %v1371, %v1371
      %v1436 = vpack.c.b16 %v1372, %v1372
      %v1437 = vpack.c.b16 %v1373, %v1373
      %v1438 = vpack.c.b16 %v1374, %v1374
      %v1439 = vpack.c.b16 %v1375, %v1375
      %v1440 = vpack.c.b16 %v1376, %v1376
      %v1441 = vpack.c.b16 %v1377, %v1377
      %v1442 = vpack.c.b16 %v1378, %v1378
      %v1443 = vpack.c.b16 %v1379, %v1379
      %v1444 = vpack.c.b16 %v1380, %v1380
      %v1445 = vpack.c.b16 %v1381, %v1381
      %v1446 = vpack.c.b16 %v1382, %v1382
      %v1447 = vpack.c.b16 %v1383, %v1383
      %v1448 = vpack.c.b16 %v1384, %v1384
      %v1449 = vpack.c.b16 %v1385, %v1385
      %v1450 = vpack.c.b16 %v1386, %v1386
      %v1451 = vpack.c.b16 %v1387, %v1387
      %v1452 = vpack.c.b16 %v1388, %v1388
      %v1453 = vpack.c.b16 %v1389, %v1389
      %v1454 = vpack.c.b16 %v1390, %v1390
      %v1455 = vpack.c.b16 %v1391, %v1391
      %v1456 = vpack.c.b16 %v1392, %v1392
      %v1457 = vpack.c.b16 %v1393, %v1393
      %v1458 = vpack.c.b16 %v1394, %v1394
      %v1459 = vpack.c.b16 %v1395, %v1395
      %v1460 = vpack.c.b16 %v1396, %v1396
      %v1461 = vpack.c.b16 %v1397, %v1397
      %v1462 = vpack.c.b16 %v1398, %v1398
      %v1463 = vpack.c.b16 %v1399, %v1399
      %v1464 = vpack.c.b16 %v1400, %v1400
      %v1465 = vpack.c.b16 %v1401, %v1401
      %v1466 = vpack.c.b16 %v1402, %v1402
      %v1467 = vpack.c.b16 %v1403, %v1403
      %v1468 = vpack.c.b16 %v1404, %v1404
      %v1469 = vpack.c.b16 %v1405, %v1405
      %v1470 = vpack.c.b16 %v1406, %v1406
      %v1471 = vpack.c.b16 %v1407, %v1407
      %v1472 = vpack.c.b16 %v1408, %v1408
      %v1473 = vpack.c.b16 %v1409, %v1409
      %v1474 = vpack.c.b16 %v1410, %v1410
      %v1475 = vpack.c.b16 %v1411, %v1411
      %v1476 = vpack.c.b16 %v1412, %v1412
      %v1477 = vpack.c.b16 %v1413, %v1413
      %v1478 = vpack.c.b16 %v1414, %v1414
      %v1479 = vpack.c.b16 %v1415, %v1415
      %v1480 = vpack.c.b16 %v1416, %v1416
      %v1481 = vpack.c.b16 %v1417, %v1417
      %v1482 = vpack.c.b16 %v1418, %v1418
      %v1483 = vpack.c.b16 %v1419, %v1419
      %v1484 = vpack.c.b16 %v1420, %v1420
      %v1485 = vpack.c.b16 %v1421, %v1421
      %v1486 = vpack.c.b16 %v1422, %v1422
      %v1487 = vpack.c.b16 %v1423, %v1423
      %v1488 = vpack.c.b16 %v1424, %v1424
      %v1489 = vpack.c.b16 %v1425, %v1425
      %v1490 = vpack.c.b16 %v1426, %v1426
      %v1491 = vpack.c.b16 %v1427, %v1427
      %v1492 = vpack.c.b16 %v1428, %v1428
      %v1493 = vpack.c.b16 %v1429, %v1429
      %v1494 = vpack.c.b16 %v1430, %v1430
      %v1495 = vpack.c.b16 %v1431, %v1431
      %v1496 = vpack.c.b16 %v1432, %v1432
      %v1497 = vpack.c.b16 %v1433, %v1433
      %v1498 = vpack.c.b16 %v1434, %v1434
      %1563 = vst [vmem:[#allocation8] sm:$0xf] %v1435
      %1564 = vst [vmem:[#allocation8 + $0x4] sm:$0xf] %v1436
      %1565 = vst [vmem:[#allocation8 + $0x8] sm:$0xf] %v1437
      %1566 = vst [vmem:[#allocation8 + $0xc] sm:$0xf] %v1438
      %1567 = vst [vmem:[#allocation8 + $0x10] sm:$0xf] %v1439
      %1568 = vst [vmem:[#allocation8 + $0x14] sm:$0xf] %v1440
      %1569 = vst [vmem:[#allocation8 + $0x18] sm:$0xf] %v1441
      %1570 = vst [vmem:[#allocation8 + $0x1c] sm:$0xf] %v1442
      %1571 = vst [vmem:[#allocation8 + $0x20] sm:$0xf] %v1443
      %1572 = vst [vmem:[#allocation8 + $0x24] sm:$0xf] %v1444
      %1573 = vst [vmem:[#allocation8 + $0x28] sm:$0xf] %v1445
      %1574 = vst [vmem:[#allocation8 + $0x2c] sm:$0xf] %v1446
      %1575 = vst [vmem:[#allocation8 + $0x30] sm:$0xf] %v1447
      %1576 = vst [vmem:[#allocation8 + $0x34] sm:$0xf] %v1448
      %1577 = vst [vmem:[#allocation8 + $0x38] sm:$0xf] %v1449
      %1578 = vst [vmem:[#allocation8 + $0x3c] sm:$0xf] %v1450
      %1579 = vst [vmem:[#allocation8 + $0x40] sm:$0xf] %v1451
      %1580 = vst [vmem:[#allocation8 + $0x44] sm:$0xf] %v1452
      %1581 = vst [vmem:[#allocation8 + $0x48] sm:$0xf] %v1453
      %1582 = vst [vmem:[#allocation8 + $0x4c] sm:$0xf] %v1454
      %1583 = vst [vmem:[#allocation8 + $0x50] sm:$0xf] %v1455
      %1584 = vst [vmem:[#allocation8 + $0x54] sm:$0xf] %v1456
      %1585 = vst [vmem:[#allocation8 + $0x58] sm:$0xf] %v1457
      %1586 = vst [vmem:[#allocation8 + $0x5c] sm:$0xf] %v1458
      %1587 = vst [vmem:[#allocation8 + $0x60] sm:$0xf] %v1459
      %1588 = vst [vmem:[#allocation8 + $0x64] sm:$0xf] %v1460
      %1589 = vst [vmem:[#allocation8 + $0x68] sm:$0xf] %v1461
      %1590 = vst [vmem:[#allocation8 + $0x6c] sm:$0xf] %v1462
      %1591 = vst [vmem:[#allocation8 + $0x70] sm:$0xf] %v1463
      %1592 = vst [vmem:[#allocation8 + $0x74] sm:$0xf] %v1464
      %1593 = vst [vmem:[#allocation8 + $0x78] sm:$0xf] %v1465
      %1594 = vst [vmem:[#allocation8 + $0x7c] sm:$0xf] %v1466
      %1595 = vst [vmem:[#allocation8 + $0x80] sm:$0xf] %v1467
      %1596 = vst [vmem:[#allocation8 + $0x84] sm:$0xf] %v1468
      %1597 = vst [vmem:[#allocation8 + $0x88] sm:$0xf] %v1469
      %1598 = vst [vmem:[#allocation8 + $0x8c] sm:$0xf] %v1470
      %1599 = vst [vmem:[#allocation8 + $0x90] sm:$0xf] %v1471
      %1600 = vst [vmem:[#allocation8 + $0x94] sm:$0xf] %v1472
      %1601 = vst [vmem:[#allocation8 + $0x98] sm:$0xf] %v1473
      %1602 = vst [vmem:[#allocation8 + $0x9c] sm:$0xf] %v1474
      %1603 = vst [vmem:[#allocation8 + $0xa0] sm:$0xf] %v1475
      %1604 = vst [vmem:[#allocation8 + $0xa4] sm:$0xf] %v1476
      %1605 = vst [vmem:[#allocation8 + $0xa8] sm:$0xf] %v1477
      %1606 = vst [vmem:[#allocation8 + $0xac] sm:$0xf] %v1478
      %1607 = vst [vmem:[#allocation8 + $0xb0] sm:$0xf] %v1479
      %1608 = vst [vmem:[#allocation8 + $0xb4] sm:$0xf] %v1480
      %1609 = vst [vmem:[#allocation8 + $0xb8] sm:$0xf] %v1481
      %1610 = vst [vmem:[#allocation8 + $0xbc] sm:$0xf] %v1482
      %1611 = vst [vmem:[#allocation8 + $0xc0] sm:$0xf] %v1483
      %1612 = vst [vmem:[#allocation8 + $0xc4] sm:$0xf] %v1484
      %1613 = vst [vmem:[#allocation8 + $0xc8] sm:$0xf] %v1485
      %1614 = vst [vmem:[#allocation8 + $0xcc] sm:$0xf] %v1486
      %1615 = vst [vmem:[#allocation8 + $0xd0] sm:$0xf] %v1487
      %1616 = vst [vmem:[#allocation8 + $0xd4] sm:$0xf] %v1488
      %1617 = vst [vmem:[#allocation8 + $0xd8] sm:$0xf] %v1489
      %1618 = vst [vmem:[#allocation8 + $0xdc] sm:$0xf] %v1490
      %1619 = vst [vmem:[#allocation8 + $0xe0] sm:$0xf] %v1491
      %1620 = vst [vmem:[#allocation8 + $0xe4] sm:$0xf] %v1492
      %1621 = vst [vmem:[#allocation8 + $0xe8] sm:$0xf] %v1493
      %1622 = vst [vmem:[#allocation8 + $0xec] sm:$0xf] %v1494
      %1623 = vst [vmem:[#allocation8 + $0xf0] sm:$0xf] %v1495
      %1624 = vst [vmem:[#allocation8 + $0xf4] sm:$0xf] %v1496
      %1625 = vst [vmem:[#allocation8 + $0xf8] sm:$0xf] %v1497
      %1626 = vst [vmem:[#allocation8 + $0xfc] sm:$0xf] %v1498
    $region29: #{tpu_custom_call.1} parent=1 // pred_fallthru
      _
    // Predicated region
    $region30: #{tpu_custom_call.1} parent=1 // pred_check
      _
    $region31: #{tpu_custom_call.1} parent=1 // pred_check_branch
      %1628 = sbr.rel (0) target = $region33
    $region32: #{tpu_custom_call.1} parent=1 // pred_region
      %s1630 = ssub.s32 4096, 4096
      %1631 = vsyncadd [#allocation5], %s1630
      %s1632 = sshll.u32 [#allocation8], 4
      %s1633 = int_to_ptr.vmem [resolvable:$true] %s1632
      %1638 = dma.vmem_to_hbm [thread:$0]  %s1633, 4096, %s3, [#allocation5], 64, 64, 4
    $region33: #{tpu_custom_call.1} parent=1 // pred_fallthru
      _
    // Predicated region
    $region34: #{tpu_custom_call.1} parent=1 // pred_check
      _
    $region35: #{tpu_custom_call.1} parent=1 // pred_check_branch
      %1640 = sbr.rel (0) target = $region37
    $region36: #{tpu_custom_call.1} parent=1 // pred_region
      %1641 = dma.done [#allocation5], 4096
    $region37: #{tpu_custom_call.1} parent=1 // pred_fallthru
      _
    %1642 = vsyncpa [#allocation4], 1
    %1643 = vsyncpa [#allocation7], 1
    %1644 = vsyncpa [#allocation5], 1

</llo_original>
